<compile_context>
chip_gen: v7x
topology: tpu7x:2x2x1
jax: 0.10.0
libtpu: 0.0.40
codegen_flags: <defaults>
</compile_context>

<pallas_src>
import jax
import jax.numpy as jnp
import numpy as np
from jax.experimental import pallas as pl
from jax.experimental.pallas import tpu as pltpu

VMEM_SPEC = pl.BlockSpec(memory_space=pltpu.MemorySpace.VMEM)


# ---------------------------------------------------------------------------
# Fused forward kernel (built per layer-count so the arg list is static)
# ---------------------------------------------------------------------------
def _make_fused_kernel(n_label_layers, n_feat_layers):
    def kernel(*refs):
        it = iter(refs)
        x_ref = next(it)          # [N, Cin]
        risk_ref = next(it)       # [N, label_in]
        h_ref = next(it)          # [N, E]
        label_params = [(next(it), next(it)) for _ in range(n_label_layers)]
        lfc_w, lfc_b = next(it), next(it)
        feat_params = [(next(it), next(it)) for _ in range(n_feat_layers)]
        w1, b1 = next(it), next(it)
        w2, b2 = next(it), next(it)
        w3, b3 = next(it), next(it)
        o_ref = next(it)          # [N, n_target]
        fts_ref = next(it)        # [N, hidden]

        # --- one-time prologue: fold degree normalization into G = HDv @ HDe^T ---
        H = h_ref[...]
        dv = pl.reciprocal(jnp.sum(H, axis=1, keepdims=True))   # [N, 1]  Dv^-1
        de = pl.reciprocal(jnp.sum(H, axis=0, keepdims=True))   # [1, E]  De^-1
        HDv = dv * H                                            # Dv^-1 H
        HDe = H * de                                            # H De^-1
        # G[i, j] = sum_e HDv[i, e] * HDe[j, e]   (A @ B^T, done once for all layers)
        G = jax.lax.dot_general(HDv, HDe, (((1,), (1,)), ((), ())),
                                preferred_element_type=jnp.float32)     # [N, N]

        def hyconv(v, theta_ref, bias_ref):
            y = jnp.dot(v, theta_ref[...],
                        preferred_element_type=jnp.float32) + bias_ref[...]
            return jnp.dot(G, y, preferred_element_type=jnp.float32)

        # --- label branch (dropout == identity in eval) ---
        label = risk_ref[...]
        for t_ref, b_ref in label_params:
            label = hyconv(label, t_ref, b_ref)
        label = jnp.dot(label, lfc_w[...],
                        preferred_element_type=jnp.float32) + lfc_b[...]   # [N, 1]

        # --- feature branch ---
        feats = x_ref[...]
        for t_ref, b_ref in feat_params:
            feats = hyconv(feats, t_ref, b_ref)

        # --- head: x*label -> mlp_l1 -> mlp_l2 (fts) -> mlp_l3 ---
        xh = feats * label
        h1 = jnp.dot(xh, w1[...], preferred_element_type=jnp.float32) + b1[...]
        h2 = jnp.dot(h1, w2[...], preferred_element_type=jnp.float32) + b2[...]
        fts_ref[...] = h2
        o_ref[...] = jnp.dot(h2, w3[...],
                             preferred_element_type=jnp.float32) + b3[...]
    return kernel


# ---------------------------------------------------------------------------
# Glue: hypergraph construction + parameter init (plain JAX / numpy)
# ---------------------------------------------------------------------------
def knn_incidence(fts, k):
    # TODO(synk): `get_full_H` / `neighbor_distance` are not provided with the module;
    # we substitute the standard kNN hypergraph (hyperedge e = node e plus its k-1
    # nearest neighbors), H[v, e] = 1 if node v belongs to hyperedge e.
    # ||a-b||^2 = ||a||^2 + ||b||^2 - 2 a.b  (matmul form, no [N,N,C] intermediate).
    sq = jnp.sum(fts * fts, axis=1)
    d2 = sq[:, None] + sq[None, :] - 2.0 * (fts @ fts.T)
    idx = jnp.argsort(d2, axis=1)[:, :k]                              # [N, k]
    n = fts.shape[0]
    H = jnp.zeros((n, n), jnp.float32)
    H = H.at[idx, jnp.arange(n)[:, None]].set(1.0)                    # H[v, e]
    edge_weight = jnp.ones((n,), jnp.float32)
    return H, edge_weight


def xavier_uniform(key, shape):
    fan_in, fan_out = shape
    bound = float(np.sqrt(6.0 / (fan_in + fan_out)))
    return jax.random.uniform(key, shape, jnp.float32, -bound, bound)


def init_params(key, in_channels, n_target, hiddens, label_in, label_hiddens):
    params = {'hyconvs': [], 'label_hyconvs': []}
    _in = in_channels
    for h in hiddens:
        key, sub = jax.random.split(key)
        params['hyconvs'].append((xavier_uniform(sub, (_in, h)),
                                  jnp.zeros((h,), jnp.float32)))
        _in = h
    _in = label_in
    for h in label_hiddens:
        key, sub = jax.random.split(key)
        params['label_hyconvs'].append((xavier_uniform(sub, (_in, h)),
                                        jnp.zeros((h,), jnp.float32)))
        _in = h
    # TODO(synk): torch `weight_init` is not provided; Linear layers use xavier-uniform
    # weights (stored as [in, out] so y = x @ W) and zero bias.
    key, k1, k2, k3, k4 = jax.random.split(key, 5)
    params['label_fc'] = (xavier_uniform(k1, (label_hiddens[-1], 1)),
                          jnp.zeros((1,), jnp.float32))
    params['mlp_l1'] = (xavier_uniform(k2, (hiddens[-1], hiddens[-1])),
                        jnp.zeros((hiddens[-1],), jnp.float32))
    params['mlp_l2'] = (xavier_uniform(k3, (hiddens[-1], hiddens[-1])),
                        jnp.zeros((hiddens[-1],), jnp.float32))
    params['mlp_l3'] = (xavier_uniform(k4, (hiddens[-1], n_target)),
                        jnp.zeros((n_target,), jnp.float32))
    return params


# ---------------------------------------------------------------------------
# Forward: graph build in JAX, whole model in ONE pallas_call
# ---------------------------------------------------------------------------
def inter_model_forward(params, x, risk, k_nearest):
    H, _ = knn_incidence(x, k_nearest)            # train_fts=None, attr=None path

    n = x.shape[0]
    hid = params['mlp_l2'][0].shape[1]
    n_target = params['mlp_l3'][0].shape[1]

    inputs = [x, risk, H]
    for theta, b in params['label_hyconvs']:
        inputs += [theta, b.reshape(1, -1)]
    inputs += [params['label_fc'][0], params['label_fc'][1].reshape(1, -1)]
    for theta, b in params['hyconvs']:
        inputs += [theta, b.reshape(1, -1)]
    for name in ('mlp_l1', 'mlp_l2', 'mlp_l3'):
        w, b = params[name]
        inputs += [w, b.reshape(1, -1)]

    kernel = _make_fused_kernel(len(params['label_hyconvs']), len(params['hyconvs']))
    out, fts = pl.pallas_call(
        kernel,
        out_shape=(jax.ShapeDtypeStruct((n, n_target), jnp.float32),
                   jax.ShapeDtypeStruct((n, hid), jnp.float32)),
        in_specs=[VMEM_SPEC] * len(inputs),
        out_specs=(VMEM_SPEC, VMEM_SPEC),
    )(*inputs)

    # Lane-sparse (N, n_target) add done in the wrapper instead of a second masked store.
    out_plus_risk = out + risk
    return out, out_plus_risk, fts


# ---------------------------------------------------------------------------
# Pure-JAX reference (direct, un-folded formulation) for correctness checking.
# ---------------------------------------------------------------------------
def _hyconv_ref(x, theta, b, H):
    y = x @ theta + b[None, :]
    dv = 1.0 / H.sum(1)
    de = 1.0 / H.sum(0)
    HDv = dv[:, None] * H
    HDe = H * de[None, :]
    y = HDe.T @ y
    return HDv @ y


def inter_model_ref(params, x, risk, k_nearest):
    H, _ = knn_incidence(x, k_nearest)
    label = risk
    for theta, b in params['label_hyconvs']:
        label = _hyconv_ref(label, theta, b, H)
    label = label @ params['label_fc'][0] + params['label_fc'][1][None, :]
    feats = x
    for theta, b in params['hyconvs']:
        feats = _hyconv_ref(feats, theta, b, H)
    feats = feats * label
    h1 = feats @ params['mlp_l1'][0] + params['mlp_l1'][1][None, :]
    h2 = h1 @ params['mlp_l2'][0] + params['mlp_l2'][1][None, :]
    o = h2 @ params['mlp_l3'][0] + params['mlp_l3'][1][None, :]
    return o, o + risk, h2


# ---------------------------------------------------------------------------
if __name__ == "__main__":
    N = 16
    in_channels = 16
    hiddens = [32, 32]
    label_in = 1
    label_hiddens = [8, 8]
    n_target = 1            # must equal label_in for the `x + risk` broadcast
    k_nearest = 4

    key = jax.random.PRNGKey(0)
    k_x, k_r, k_p = jax.random.split(key, 3)
    x = jax.random.normal(k_x, (N, in_channels), jnp.float32)
    risk = jax.random.normal(k_r, (N, label_in), jnp.float32)

    params = init_params(k_p, in_channels, n_target, hiddens, label_in, label_hiddens)

    out, out_plus_risk, fts = inter_model_forward(params, x, risk, k_nearest)
    jax.block_until_ready((out, out_plus_risk, fts))

    ref_out, ref_opr, ref_fts = inter_model_ref(params, x, risk, k_nearest)
    np.testing.assert_allclose(np.asarray(out), np.asarray(ref_out), rtol=1e-4, atol=1e-4)
    np.testing.assert_allclose(np.asarray(out_plus_risk), np.asarray(ref_opr), rtol=1e-4, atol=1e-4)
    np.testing.assert_allclose(np.asarray(fts), np.asarray(ref_fts), rtol=1e-4, atol=1e-4)

    print("KERNEL_OK")
</pallas_src>

<mosaic_0001>
module attributes {stable_mosaic.version = 11 : i64} {
  func.func @kernel(%arg0: memref<16x16xf32, #tpu.memory_space<vmem>>, %arg1: memref<16x1xf32, #tpu.memory_space<vmem>>, %arg2: memref<16x16xf32, #tpu.memory_space<vmem>>, %arg3: memref<1x8xf32, #tpu.memory_space<vmem>>, %arg4: memref<1x8xf32, #tpu.memory_space<vmem>>, %arg5: memref<8x8xf32, #tpu.memory_space<vmem>>, %arg6: memref<1x8xf32, #tpu.memory_space<vmem>>, %arg7: memref<8x1xf32, #tpu.memory_space<vmem>>, %arg8: memref<1x1xf32, #tpu.memory_space<vmem>>, %arg9: memref<16x32xf32, #tpu.memory_space<vmem>>, %arg10: memref<1x32xf32, #tpu.memory_space<vmem>>, %arg11: memref<32x32xf32, #tpu.memory_space<vmem>>, %arg12: memref<1x32xf32, #tpu.memory_space<vmem>>, %arg13: memref<32x32xf32, #tpu.memory_space<vmem>>, %arg14: memref<1x32xf32, #tpu.memory_space<vmem>>, %arg15: memref<32x32xf32, #tpu.memory_space<vmem>>, %arg16: memref<1x32xf32, #tpu.memory_space<vmem>>, %arg17: memref<32x1xf32, #tpu.memory_space<vmem>>, %arg18: memref<1x1xf32, #tpu.memory_space<vmem>>, %arg19: memref<16x1xf32, #tpu.memory_space<vmem>>, %arg20: memref<16x32xf32, #tpu.memory_space<vmem>>) attributes {dimension_semantics = [], scalar_prefetch = 0 : i64, scratch_operands = 0 : i64, tpu.core_type = #tpu.core_type<tc>} {
    %c0 = arith.constant 0 : index
    %c0_0 = arith.constant 0 : index
    %0 = vector.load %arg2[%c0, %c0_0] : memref<16x16xf32, #tpu.memory_space<vmem>>, vector<16x16xf32>
    %cst = arith.constant dense<0.000000e+00> : vector<16xf32>
    %1 = vector.multi_reduction <add>, %0, %cst [1] : vector<16x16xf32> to vector<16xf32>
    %2 = vector.shape_cast %1 : vector<16xf32> to vector<16x1xf32>
    %3 = tpu.reciprocal %2 : vector<16x1xf32> -> vector<16x1xf32>
    %cst_1 = arith.constant dense<0.000000e+00> : vector<16xf32>
    %4 = vector.multi_reduction <add>, %0, %cst_1 [0] : vector<16x16xf32> to vector<16xf32>
    %5 = vector.shape_cast %4 : vector<16xf32> to vector<1x16xf32>
    %6 = tpu.reciprocal %5 : vector<1x16xf32> -> vector<1x16xf32>
    %7 = vector.broadcast %3 : vector<16x1xf32> to vector<16x16xf32>
    %8 = arith.mulf %7, %0 : vector<16x16xf32>
    %9 = vector.broadcast %6 : vector<1x16xf32> to vector<16x16xf32>
    %10 = arith.mulf %0, %9 : vector<16x16xf32>
    %cst_2 = arith.constant dense<0.000000e+00> : vector<16x16xf32>
    %11 = tpu.matmul %8, %10, %cst_2 {dimension_numbers = #tpu.dot_dimension_numbers<[1], [1], [0], [0], [0, 0, 1, 0], [], []>} : vector<16x16xf32>, vector<16x16xf32>, vector<16x16xf32> -> vector<16x16xf32>
    %c0_3 = arith.constant 0 : index
    %c0_4 = arith.constant 0 : index
    %12 = vector.load %arg1[%c0_3, %c0_4] : memref<16x1xf32, #tpu.memory_space<vmem>>, vector<16x1xf32>
    %c0_5 = arith.constant 0 : index
    %c0_6 = arith.constant 0 : index
    %13 = vector.load %arg3[%c0_5, %c0_6] : memref<1x8xf32, #tpu.memory_space<vmem>>, vector<1x8xf32>
    %cst_7 = arith.constant dense<0.000000e+00> : vector<16x8xf32>
    %14 = tpu.matmul %12, %13, %cst_7 {dimension_numbers = #tpu.dot_dimension_numbers<[1], [0], [0], [1], [0, 0, 1, 1], [], []>} : vector<16x1xf32>, vector<1x8xf32>, vector<16x8xf32> -> vector<16x8xf32>
    %c0_8 = arith.constant 0 : index
    %c0_9 = arith.constant 0 : index
    %15 = vector.load %arg4[%c0_8, %c0_9] : memref<1x8xf32, #tpu.memory_space<vmem>>, vector<1x8xf32>
    %16 = vector.broadcast %15 : vector<1x8xf32> to vector<16x8xf32>
    %17 = arith.addf %14, %16 : vector<16x8xf32>
    %cst_10 = arith.constant dense<0.000000e+00> : vector<16x8xf32>
    %18 = tpu.matmul %11, %17, %cst_10 {dimension_numbers = #tpu.dot_dimension_numbers<[1], [0], [0], [1], [0, 0, 1, 1], [], []>} : vector<16x16xf32>, vector<16x8xf32>, vector<16x8xf32> -> vector<16x8xf32>
    %c0_11 = arith.constant 0 : index
    %c0_12 = arith.constant 0 : index
    %19 = vector.load %arg5[%c0_11, %c0_12] : memref<8x8xf32, #tpu.memory_space<vmem>>, vector<8x8xf32>
    %cst_13 = arith.constant dense<0.000000e+00> : vector<16x8xf32>
    %20 = tpu.matmul %18, %19, %cst_13 {dimension_numbers = #tpu.dot_dimension_numbers<[1], [0], [0], [1], [0, 0, 1, 1], [], []>} : vector<16x8xf32>, vector<8x8xf32>, vector<16x8xf32> -> vector<16x8xf32>
    %c0_14 = arith.constant 0 : index
    %c0_15 = arith.constant 0 : index
    %21 = vector.load %arg6[%c0_14, %c0_15] : memref<1x8xf32, #tpu.memory_space<vmem>>, vector<1x8xf32>
    %22 = vector.broadcast %21 : vector<1x8xf32> to vector<16x8xf32>
    %23 = arith.addf %20, %22 : vector<16x8xf32>
    %cst_16 = arith.constant dense<0.000000e+00> : vector<16x8xf32>
    %24 = tpu.matmul %11, %23, %cst_16 {dimension_numbers = #tpu.dot_dimension_numbers<[1], [0], [0], [1], [0, 0, 1, 1], [], []>} : vector<16x16xf32>, vector<16x8xf32>, vector<16x8xf32> -> vector<16x8xf32>
    %c0_17 = arith.constant 0 : index
    %c0_18 = arith.constant 0 : index
    %25 = vector.load %arg7[%c0_17, %c0_18] : memref<8x1xf32, #tpu.memory_space<vmem>>, vector<8x1xf32>
    %cst_19 = arith.constant dense<0.000000e+00> : vector<16x1xf32>
    %26 = tpu.matmul %24, %25, %cst_19 {dimension_numbers = #tpu.dot_dimension_numbers<[1], [0], [0], [1], [0, 0, 1, 1], [], []>} : vector<16x8xf32>, vector<8x1xf32>, vector<16x1xf32> -> vector<16x1xf32>
    %c0_20 = arith.constant 0 : index
    %c0_21 = arith.constant 0 : index
    %27 = vector.load %arg8[%c0_20, %c0_21] : memref<1x1xf32, #tpu.memory_space<vmem>>, vector<1x1xf32>
    %28 = vector.broadcast %27 : vector<1x1xf32> to vector<16x1xf32>
    %29 = arith.addf %26, %28 : vector<16x1xf32>
    %c0_22 = arith.constant 0 : index
    %c0_23 = arith.constant 0 : index
    %30 = vector.load %arg0[%c0_22, %c0_23] : memref<16x16xf32, #tpu.memory_space<vmem>>, vector<16x16xf32>
    %c0_24 = arith.constant 0 : index
    %c0_25 = arith.constant 0 : index
    %31 = vector.load %arg9[%c0_24, %c0_25] : memref<16x32xf32, #tpu.memory_space<vmem>>, vector<16x32xf32>
    %cst_26 = arith.constant dense<0.000000e+00> : vector<16x32xf32>
    %32 = tpu.matmul %30, %31, %cst_26 {dimension_numbers = #tpu.dot_dimension_numbers<[1], [0], [0], [1], [0, 0, 1, 1], [], []>} : vector<16x16xf32>, vector<16x32xf32>, vector<16x32xf32> -> vector<16x32xf32>
    %c0_27 = arith.constant 0 : index
    %c0_28 = arith.constant 0 : index
    %33 = vector.load %arg10[%c0_27, %c0_28] : memref<1x32xf32, #tpu.memory_space<vmem>>, vector<1x32xf32>
    %34 = vector.broadcast %33 : vector<1x32xf32> to vector<16x32xf32>
    %35 = arith.addf %32, %34 : vector<16x32xf32>
    %cst_29 = arith.constant dense<0.000000e+00> : vector<16x32xf32>
    %36 = tpu.matmul %11, %35, %cst_29 {dimension_numbers = #tpu.dot_dimension_numbers<[1], [0], [0], [1], [0, 0, 1, 1], [], []>} : vector<16x16xf32>, vector<16x32xf32>, vector<16x32xf32> -> vector<16x32xf32>
    %c0_30 = arith.constant 0 : index
    %c0_31 = arith.constant 0 : index
    %37 = vector.load %arg11[%c0_30, %c0_31] : memref<32x32xf32, #tpu.memory_space<vmem>>, vector<32x32xf32>
    %cst_32 = arith.constant dense<0.000000e+00> : vector<16x32xf32>
    %38 = tpu.matmul %36, %37, %cst_32 {dimension_numbers = #tpu.dot_dimension_numbers<[1], [0], [0], [1], [0, 0, 1, 1], [], []>} : vector<16x32xf32>, vector<32x32xf32>, vector<16x32xf32> -> vector<16x32xf32>
    %c0_33 = arith.constant 0 : index
    %c0_34 = arith.constant 0 : index
    %39 = vector.load %arg12[%c0_33, %c0_34] : memref<1x32xf32, #tpu.memory_space<vmem>>, vector<1x32xf32>
    %40 = vector.broadcast %39 : vector<1x32xf32> to vector<16x32xf32>
    %41 = arith.addf %38, %40 : vector<16x32xf32>
    %cst_35 = arith.constant dense<0.000000e+00> : vector<16x32xf32>
    %42 = tpu.matmul %11, %41, %cst_35 {dimension_numbers = #tpu.dot_dimension_numbers<[1], [0], [0], [1], [0, 0, 1, 1], [], []>} : vector<16x16xf32>, vector<16x32xf32>, vector<16x32xf32> -> vector<16x32xf32>
    %43 = vector.broadcast %29 : vector<16x1xf32> to vector<16x32xf32>
    %44 = arith.mulf %42, %43 : vector<16x32xf32>
    %c0_36 = arith.constant 0 : index
    %c0_37 = arith.constant 0 : index
    %45 = vector.load %arg13[%c0_36, %c0_37] : memref<32x32xf32, #tpu.memory_space<vmem>>, vector<32x32xf32>
    %cst_38 = arith.constant dense<0.000000e+00> : vector<16x32xf32>
    %46 = tpu.matmul %44, %45, %cst_38 {dimension_numbers = #tpu.dot_dimension_numbers<[1], [0], [0], [1], [0, 0, 1, 1], [], []>} : vector<16x32xf32>, vector<32x32xf32>, vector<16x32xf32> -> vector<16x32xf32>
    %c0_39 = arith.constant 0 : index
    %c0_40 = arith.constant 0 : index
    %47 = vector.load %arg14[%c0_39, %c0_40] : memref<1x32xf32, #tpu.memory_space<vmem>>, vector<1x32xf32>
    %48 = vector.broadcast %47 : vector<1x32xf32> to vector<16x32xf32>
    %49 = arith.addf %46, %48 : vector<16x32xf32>
    %c0_41 = arith.constant 0 : index
    %c0_42 = arith.constant 0 : index
    %50 = vector.load %arg15[%c0_41, %c0_42] : memref<32x32xf32, #tpu.memory_space<vmem>>, vector<32x32xf32>
    %cst_43 = arith.constant dense<0.000000e+00> : vector<16x32xf32>
    %51 = tpu.matmul %49, %50, %cst_43 {dimension_numbers = #tpu.dot_dimension_numbers<[1], [0], [0], [1], [0, 0, 1, 1], [], []>} : vector<16x32xf32>, vector<32x32xf32>, vector<16x32xf32> -> vector<16x32xf32>
    %c0_44 = arith.constant 0 : index
    %c0_45 = arith.constant 0 : index
    %52 = vector.load %arg16[%c0_44, %c0_45] : memref<1x32xf32, #tpu.memory_space<vmem>>, vector<1x32xf32>
    %53 = vector.broadcast %52 : vector<1x32xf32> to vector<16x32xf32>
    %54 = arith.addf %51, %53 : vector<16x32xf32>
    %c0_46 = arith.constant 0 : index
    %c0_47 = arith.constant 0 : index
    %55 = vector.load %arg20[%c0_46, %c0_47] : memref<16x32xf32, #tpu.memory_space<vmem>>, vector<16x32xf32>
    tpu.vector_store %arg20[%c0_46, %c0_47], %54 {strides = array<i32>} : memref<16x32xf32, #tpu.memory_space<vmem>>, vector<16x32xf32>,
    %c0_48 = arith.constant 0 : index
    %c0_49 = arith.constant 0 : index
    %56 = vector.load %arg17[%c0_48, %c0_49] : memref<32x1xf32, #tpu.memory_space<vmem>>, vector<32x1xf32>
    %cst_50 = arith.constant dense<0.000000e+00> : vector<16x1xf32>
    %57 = tpu.matmul %54, %56, %cst_50 {dimension_numbers = #tpu.dot_dimension_numbers<[1], [0], [0], [1], [0, 0, 1, 1], [], []>} : vector<16x32xf32>, vector<32x1xf32>, vector<16x1xf32> -> vector<16x1xf32>
    %c0_51 = arith.constant 0 : index
    %c0_52 = arith.constant 0 : index
    %58 = vector.load %arg18[%c0_51, %c0_52] : memref<1x1xf32, #tpu.memory_space<vmem>>, vector<1x1xf32>
    %59 = vector.broadcast %58 : vector<1x1xf32> to vector<16x1xf32>
    %60 = arith.addf %57, %59 : vector<16x1xf32>
    %c0_53 = arith.constant 0 : index
    %c0_54 = arith.constant 0 : index
    %61 = vector.load %arg19[%c0_53, %c0_54] : memref<16x1xf32, #tpu.memory_space<vmem>>, vector<16x1xf32>
    tpu.vector_store %arg19[%c0_53, %c0_54], %60 {strides = array<i32>} : memref<16x1xf32, #tpu.memory_space<vmem>>, vector<16x1xf32>,
    return
  }
}

</mosaic_0001>

<llo_original>
// kernel: tpu_custom_call.1
$region0: #{tpu_custom_call.1}
  #allocation0 [shape = 'u32[]', space=smem, size = 0x4, offset = 0x4, fixed_abs, tag = 'smem constant byte address 0x4 - core index']
  #allocation1 [shape = 'u32[144,128]{1,0:T(1,128)}', space=vmem, size = 0x12000, scoped, tag = 'internal scratch']
  #allocation2 [shape = 'f32[1,1]{1,0:T(1,128)S(1)}', space=vmem, size = 0x200, scoped, tag = 'scoped memory for tpu_custom_call.1']
  #allocation3 [shape = 'f32[1,1]{1,0:T(1,128)S(1)}', space=vmem, size = 0x200, scoped, tag = 'scoped memory for tpu_custom_call.1']
  %s0 = inlined_call_operand.hbm [shape: f32[16,16], index: 0, kind: input, shape index: {}]
  %s1 = inlined_call_operand.vmem [shape: f32[16,1], index: 1, kind: input, shape index: {}]
  %s2 = inlined_call_operand.hbm [shape: f32[16,16], index: 2, kind: input, shape index: {}]
  %s3 = inlined_call_operand.hbm [shape: f32[1,8], index: 3, kind: input, shape index: {}]
  %s4 = inlined_call_operand.hbm [shape: f32[1,8], index: 4, kind: input, shape index: {}]
  %s5 = inlined_call_operand.hbm [shape: f32[8,8], index: 5, kind: input, shape index: {}]
  %s6 = inlined_call_operand.hbm [shape: f32[1,8], index: 6, kind: input, shape index: {}]
  %s7 = inlined_call_operand.vmem [shape: f32[8,1], index: 7, kind: input, shape index: {}]
  %s8 = inlined_call_operand.<no memory space> [shape: f32[1,1], index: 8, kind: input, shape index: {}]
  %s9 = inlined_call_operand.hbm [shape: f32[16,32], index: 9, kind: input, shape index: {}]
  %s10 = inlined_call_operand.vmem [shape: f32[1,32], index: 10, kind: input, shape index: {}]
  %s11 = inlined_call_operand.vmem [shape: f32[32,32], index: 11, kind: input, shape index: {}]
  %s12 = inlined_call_operand.vmem [shape: f32[1,32], index: 12, kind: input, shape index: {}]
  %s13 = inlined_call_operand.vmem [shape: f32[32,32], index: 13, kind: input, shape index: {}]
  %s14 = inlined_call_operand.vmem [shape: f32[1,32], index: 14, kind: input, shape index: {}]
  %s15 = inlined_call_operand.vmem [shape: f32[32,32], index: 15, kind: input, shape index: {}]
  %s16 = inlined_call_operand.vmem [shape: f32[1,32], index: 16, kind: input, shape index: {}]
  %s17 = inlined_call_operand.vmem [shape: f32[32,1], index: 17, kind: input, shape index: {}]
  %s18 = inlined_call_operand.<no memory space> [shape: f32[1,1], index: 18, kind: input, shape index: {}]
  %s19 = inlined_call_operand.vmem [shape: f32[16,1], index: 19, kind: output, shape index: {0}]
  %s20 = inlined_call_operand.hbm [shape: f32[16,32], index: 20, kind: output, shape index: {1}]
  %21 = xla_tuple %s19, %s20
  %s22 = sld [smem:[#allocation0]]
  $region122: #{tpu_custom_call.1} parent=0
    _
  %s24 = ssub.s32 1, %s22
  %s25 = scalar_select 0, %s24, %s22
  %v26 = vstv %s8
  %27 = vst [vmem:[#allocation2] sm:$0x1] %v26
  %v28 = vstv %s18
  %29 = vst [vmem:[#allocation3] sm:$0x1] %v28
  $region1: #{tpu_custom_call.1} parent=0
    #allocation4 [shape = 'u8[8192]{0}', space=vmem, size = 0x2000, scoped, tag = 'input window, operand 0, single buffered']
    #allocation5 [shape = 's32[1]{0}', space=sflag, size = 0x4, scoped, tag = 'scoped memory for tpu_custom_call.1']
    #allocation6 [shape = 's32[1]{0}', space=sflag, size = 0x4, scoped, tag = 'scoped memory for tpu_custom_call.1']
    #allocation7 [shape = 'u8[8192]{0}', space=vmem, size = 0x2000, scoped, tag = 'input window, operand 2, single buffered']
    #allocation8 [shape = 's32[1]{0}', space=sflag, size = 0x4, scoped, tag = 'scoped memory for tpu_custom_call.1']
    #allocation9 [shape = 'u8[512]{0}', space=vmem, size = 0x400, scoped, tag = 'input window, operand 3, single buffered']
    #allocation10 [shape = 'u8[512]{0}', space=vmem, size = 0x400, scoped, tag = 'input window, operand 4, single buffered']
    #allocation11 [shape = 's32[1]{0}', space=sflag, size = 0x4, scoped, tag = 'scoped memory for tpu_custom_call.1']
    #allocation12 [shape = 'u8[4096]{0}', space=vmem, size = 0x1000, scoped, tag = 'input window, operand 5, single buffered']
    #allocation13 [shape = 'u8[512]{0}', space=vmem, size = 0x400, scoped, tag = 'input window, operand 6, single buffered']
    #allocation14 [shape = 's32[1]{0}', space=sflag, size = 0x4, scoped, tag = 'scoped memory for tpu_custom_call.1']
    #allocation15 [shape = 'u8[8192]{0}', space=vmem, size = 0x2000, scoped, tag = 'input window, operand 9, single buffered']
    #allocation16 [shape = 'u8[8192]{0}', space=vmem, size = 0x2000, scoped, tag = 'output window, operand 1, single buffered']
    %30 = vsyncpa [#allocation5], 0
    %31 = vsyncpa [#allocation8], 0
    %32 = vsyncpa [#allocation11], 0
    %33 = vsyncpa [#allocation14], 0
    %34 = vsyncpa [#allocation6], 0
    // Predicated region
    $region2: #{tpu_custom_call.1} parent=1 // pred_check
      _
    $region3: #{tpu_custom_call.1} parent=1 // pred_check_branch
      %36 = sbr.rel (0) target = $region5
    $region4: #{tpu_custom_call.1} parent=1 // pred_region
      %s38 = ssub.s32 256, 256
      %39 = vsyncadd [#allocation5], %s38
      %s40 = sshll.u32 [#allocation4], 4
      %s41 = int_to_ptr.vmem [resolvable:$true] %s40
      %46 = dma.hbm_to_vmem [thread:$0]  %s0, 256, %s41, [#allocation5], 128, 128, 8
    $region5: #{tpu_custom_call.1} parent=1 // pred_fallthru
      _
    // Predicated region
    $region6: #{tpu_custom_call.1} parent=1 // pred_check
      _
    $region7: #{tpu_custom_call.1} parent=1 // pred_check_branch
      %48 = sbr.rel (0) target = $region9
    $region8: #{tpu_custom_call.1} parent=1 // pred_region
      _
    $region9: #{tpu_custom_call.1} parent=1 // pred_fallthru
      _
    // Predicated region
    $region10: #{tpu_custom_call.1} parent=1 // pred_check
      _
    $region11: #{tpu_custom_call.1} parent=1 // pred_check_branch
      %50 = sbr.rel (0) target = $region13
    $region12: #{tpu_custom_call.1} parent=1 // pred_region
      %s52 = ssub.s32 256, 256
      %53 = vsyncadd [#allocation8], %s52
      %s54 = sshll.u32 [#allocation7], 4
      %s55 = int_to_ptr.vmem [resolvable:$true] %s54
      %60 = dma.hbm_to_vmem [thread:$0]  %s2, 256, %s55, [#allocation8], 128, 128, 8
    $region13: #{tpu_custom_call.1} parent=1 // pred_fallthru
      _
    // Predicated region
    $region14: #{tpu_custom_call.1} parent=1 // pred_check
      _
    $region15: #{tpu_custom_call.1} parent=1 // pred_check_branch
      %62 = sbr.rel (0) target = $region17
    $region16: #{tpu_custom_call.1} parent=1 // pred_region
      %s64 = ssub.s32 16, 16
      %65 = vsyncadd [#allocation8], %s64
      %s67 = sshll.u32 [#allocation9], 4
      %s68 = int_to_ptr.vmem [resolvable:$true] %s67
      %70 = dma.hbm_to_vmem [thread:$0]  %s3, 16, %s68, [#allocation8]
    $region17: #{tpu_custom_call.1} parent=1 // pred_fallthru
      _
    // Predicated region
    $region18: #{tpu_custom_call.1} parent=1 // pred_check
      _
    $region19: #{tpu_custom_call.1} parent=1 // pred_check_branch
      %72 = sbr.rel (0) target = $region21
    $region20: #{tpu_custom_call.1} parent=1 // pred_region
      %s74 = ssub.s32 16, 16
      %75 = vsyncadd [#allocation11], %s74
      %s77 = sshll.u32 [#allocation10], 4
      %s78 = int_to_ptr.vmem [resolvable:$true] %s77
      %80 = dma.hbm_to_vmem [thread:$0]  %s4, 16, %s78, [#allocation11]
    $region21: #{tpu_custom_call.1} parent=1 // pred_fallthru
      _
    // Predicated region
    $region22: #{tpu_custom_call.1} parent=1 // pred_check
      _
    $region23: #{tpu_custom_call.1} parent=1 // pred_check_branch
      %82 = sbr.rel (0) target = $region25
    $region24: #{tpu_custom_call.1} parent=1 // pred_region
      %s84 = ssub.s32 128, 128
      %85 = vsyncadd [#allocation11], %s84
      %s87 = sshll.u32 [#allocation12], 4
      %s88 = int_to_ptr.vmem [resolvable:$true] %s87
      %90 = dma.hbm_to_vmem [thread:$0]  %s5, 128, %s88, [#allocation11]
    $region25: #{tpu_custom_call.1} parent=1 // pred_fallthru
      _
    // Predicated region
    $region26: #{tpu_custom_call.1} parent=1 // pred_check
      _
    $region27: #{tpu_custom_call.1} parent=1 // pred_check_branch
      %92 = sbr.rel (0) target = $region29
    $region28: #{tpu_custom_call.1} parent=1 // pred_region
      %s94 = ssub.s32 16, 16
      %95 = vsyncadd [#allocation14], %s94
      %s97 = sshll.u32 [#allocation13], 4
      %s98 = int_to_ptr.vmem [resolvable:$true] %s97
      %100 = dma.hbm_to_vmem [thread:$0]  %s6, 16, %s98, [#allocation14]
    $region29: #{tpu_custom_call.1} parent=1 // pred_fallthru
      _
    // Predicated region
    $region30: #{tpu_custom_call.1} parent=1 // pred_check
      _
    $region31: #{tpu_custom_call.1} parent=1 // pred_check_branch
      %102 = sbr.rel (0) target = $region33
    $region32: #{tpu_custom_call.1} parent=1 // pred_region
      _
    $region33: #{tpu_custom_call.1} parent=1 // pred_fallthru
      _
    // Predicated region
    $region34: #{tpu_custom_call.1} parent=1 // pred_check
      _
    $region35: #{tpu_custom_call.1} parent=1 // pred_check_branch
      %104 = sbr.rel (0) target = $region37
    $region36: #{tpu_custom_call.1} parent=1 // pred_region
      _
    $region37: #{tpu_custom_call.1} parent=1 // pred_fallthru
      _
    // Predicated region
    $region38: #{tpu_custom_call.1} parent=1 // pred_check
      _
    $region39: #{tpu_custom_call.1} parent=1 // pred_check_branch
      %106 = sbr.rel (0) target = $region41
    $region40: #{tpu_custom_call.1} parent=1 // pred_region
      %s108 = ssub.s32 256, 256
      %109 = vsyncadd [#allocation14], %s108
      %s110 = sshll.u32 [#allocation15], 4
      %s111 = int_to_ptr.vmem [resolvable:$true] %s110
      %116 = dma.hbm_to_vmem [thread:$0]  %s9, 256, %s111, [#allocation14], 128, 128, 8
    $region41: #{tpu_custom_call.1} parent=1 // pred_fallthru
      _
    // Predicated region
    $region42: #{tpu_custom_call.1} parent=1 // pred_check
      _
    $region43: #{tpu_custom_call.1} parent=1 // pred_check_branch
      %118 = sbr.rel (0) target = $region45
    $region44: #{tpu_custom_call.1} parent=1 // pred_region
      _
    $region45: #{tpu_custom_call.1} parent=1 // pred_fallthru
      _
    // Predicated region
    $region46: #{tpu_custom_call.1} parent=1 // pred_check
      _
    $region47: #{tpu_custom_call.1} parent=1 // pred_check_branch
      %120 = sbr.rel (0) target = $region49
    $region48: #{tpu_custom_call.1} parent=1 // pred_region
      _
    $region49: #{tpu_custom_call.1} parent=1 // pred_fallthru
      _
    // Predicated region
    $region50: #{tpu_custom_call.1} parent=1 // pred_check
      _
    $region51: #{tpu_custom_call.1} parent=1 // pred_check_branch
      %122 = sbr.rel (0) target = $region53
    $region52: #{tpu_custom_call.1} parent=1 // pred_region
      _
    $region53: #{tpu_custom_call.1} parent=1 // pred_fallthru
      _
    // Predicated region
    $region54: #{tpu_custom_call.1} parent=1 // pred_check
      _
    $region55: #{tpu_custom_call.1} parent=1 // pred_check_branch
      %124 = sbr.rel (0) target = $region57
    $region56: #{tpu_custom_call.1} parent=1 // pred_region
      _
    $region57: #{tpu_custom_call.1} parent=1 // pred_fallthru
      _
    // Predicated region
    $region58: #{tpu_custom_call.1} parent=1 // pred_check
      _
    $region59: #{tpu_custom_call.1} parent=1 // pred_check_branch
      %126 = sbr.rel (0) target = $region61
    $region60: #{tpu_custom_call.1} parent=1 // pred_region
      _
    $region61: #{tpu_custom_call.1} parent=1 // pred_fallthru
      _
    // Predicated region
    $region62: #{tpu_custom_call.1} parent=1 // pred_check
      _
    $region63: #{tpu_custom_call.1} parent=1 // pred_check_branch
      %128 = sbr.rel (0) target = $region65
    $region64: #{tpu_custom_call.1} parent=1 // pred_region
      _
    $region65: #{tpu_custom_call.1} parent=1 // pred_fallthru
      _
    // Predicated region
    $region66: #{tpu_custom_call.1} parent=1 // pred_check
      _
    $region67: #{tpu_custom_call.1} parent=1 // pred_check_branch
      %130 = sbr.rel (0) target = $region69
    $region68: #{tpu_custom_call.1} parent=1 // pred_region
      _
    $region69: #{tpu_custom_call.1} parent=1 // pred_fallthru
      _
    // Predicated region
    $region70: #{tpu_custom_call.1} parent=1 // pred_check
      _
    $region71: #{tpu_custom_call.1} parent=1 // pred_check_branch
      %132 = sbr.rel (0) target = $region73
    $region72: #{tpu_custom_call.1} parent=1 // pred_region
      _
    $region73: #{tpu_custom_call.1} parent=1 // pred_fallthru
      _
    // Predicated region
    $region74: #{tpu_custom_call.1} parent=1 // pred_check
      _
    $region75: #{tpu_custom_call.1} parent=1 // pred_check_branch
      %134 = sbr.rel (0) target = $region77
    $region76: #{tpu_custom_call.1} parent=1 // pred_region
      _
    $region77: #{tpu_custom_call.1} parent=1 // pred_fallthru
      _
    // Predicated region
    $region78: #{tpu_custom_call.1} parent=1 // pred_check
      _
    $region79: #{tpu_custom_call.1} parent=1 // pred_check_branch
      %136 = sbr.rel (0) target = $region81
    $region80: #{tpu_custom_call.1} parent=1 // pred_region
      %137 = dma.done [#allocation5], 256
    $region81: #{tpu_custom_call.1} parent=1 // pred_fallthru
      _
    // Predicated region
    $region82: #{tpu_custom_call.1} parent=1 // pred_check
      _
    $region83: #{tpu_custom_call.1} parent=1 // pred_check_branch
      %139 = sbr.rel (0) target = $region85
    $region84: #{tpu_custom_call.1} parent=1 // pred_region
      %140 = dma.done [#allocation8], 256
    $region85: #{tpu_custom_call.1} parent=1 // pred_fallthru
      _
    // Predicated region
    $region86: #{tpu_custom_call.1} parent=1 // pred_check
      _
    $region87: #{tpu_custom_call.1} parent=1 // pred_check_branch
      %142 = sbr.rel (0) target = $region89
    $region88: #{tpu_custom_call.1} parent=1 // pred_region
      %143 = dma.done [#allocation8], 16
    $region89: #{tpu_custom_call.1} parent=1 // pred_fallthru
      _
    // Predicated region
    $region90: #{tpu_custom_call.1} parent=1 // pred_check
      _
    $region91: #{tpu_custom_call.1} parent=1 // pred_check_branch
      %145 = sbr.rel (0) target = $region93
    $region92: #{tpu_custom_call.1} parent=1 // pred_region
      %146 = dma.done [#allocation11], 16
    $region93: #{tpu_custom_call.1} parent=1 // pred_fallthru
      _
    // Predicated region
    $region94: #{tpu_custom_call.1} parent=1 // pred_check
      _
    $region95: #{tpu_custom_call.1} parent=1 // pred_check_branch
      %148 = sbr.rel (0) target = $region97
    $region96: #{tpu_custom_call.1} parent=1 // pred_region
      %149 = dma.done [#allocation11], 128
    $region97: #{tpu_custom_call.1} parent=1 // pred_fallthru
      _
    // Predicated region
    $region98: #{tpu_custom_call.1} parent=1 // pred_check
      _
    $region99: #{tpu_custom_call.1} parent=1 // pred_check_branch
      %151 = sbr.rel (0) target = $region101
    $region100: #{tpu_custom_call.1} parent=1 // pred_region
      %152 = dma.done [#allocation14], 16
    $region101: #{tpu_custom_call.1} parent=1 // pred_fallthru
      _
    // Predicated region
    $region102: #{tpu_custom_call.1} parent=1 // pred_check
      _
    $region103: #{tpu_custom_call.1} parent=1 // pred_check_branch
      %154 = sbr.rel (0) target = $region105
    $region104: #{tpu_custom_call.1} parent=1 // pred_region
      %155 = dma.done [#allocation14], 256
    $region105: #{tpu_custom_call.1} parent=1 // pred_fallthru
      _
    %v156 = vld [vmem:[#allocation7] sm:$0xff]
    %v157 = vld [vmem:[#allocation7 + $0x8] sm:$0xff]
    %vm158 = vcmask 130048
    %v159 = vsel %vm158, %v156, 0.0
    %160 = vadd.xlane.f32.xlu0 %v159
    %v161 = vpop.xlane.xlu0 %160
    %v162 = vsel %vm158, %v157, 0.0
    %163 = vadd.xlane.f32.xlu0 %v162
    %v164 = vpop.xlane.xlu0 %163
    %v165 = vrcp.pop %v161
    %v166 = vrcp.pop %v164
    %v167 = vadd.f32 %v159, %v162
    %v168 = vrot.slane %v167, 4
    %v169 = vadd.f32 %v167, %v168
    %v170 = vrot.slane %v169, 2
    %v171 = vadd.f32 %v169, %v170
    %v172 = vrot.slane %v171, 1
    %v173 = vadd.f32 %v171, %v172
    %v174 = vrcp.pop %v173
    %v175 = vmul.f32 %v165, %v156
    %v176 = vmul.f32 %v166, %v157
    %v177 = vmul.f32 %v156, %v174
    %v178 = vmul.f32 %v157, %v174
    %v180 = vsel %vm158, %v175, 0
    %v183 = vsel %vm158, %v176, 0
    %v186 = vsel %vm158, %v177, 0
    %v189 = vsel %vm158, %v178, 0
    %191 = vmatprep.subr.mxu0 0.0
    %192 = vmatpush1.xpose.msra.mxu0 %v186
    %193 = vmatprep.subr.mxu0 0.0
    %194 = vmatpush1.xpose.msra.mxu0 %v189
    %195 = vmatprep.subr.mxu0 0.0
    %196 = vmatpush1.xpose.msra.mxu0 0.0
    %197 = vmatprep.subr.mxu0 0.0
    %198 = vmatpush1.xpose.msra.mxu0 0.0
    %199 = vmatprep.subr.mxu0 0.0
    %200 = vmatpush1.xpose.msra.mxu0 0.0
    %201 = vmatprep.subr.mxu0 0.0
    %202 = vmatpush1.xpose.msra.mxu0 0.0
    %203 = vmatprep.subr.mxu0 0.0
    %204 = vmatpush1.xpose.msra.mxu0 0.0
    %205 = vmatprep.subr.mxu0 0.0
    %206 = vmatpush1.xpose.msra.mxu0 0.0
    %207 = vmatprep.subr.mxu0 0.0
    %208 = vmatpush1.xpose.msra.mxu0 0.0
    %209 = vmatprep.subr.mxu0 0.0
    %210 = vmatpush1.xpose.msra.mxu0 0.0
    %211 = vmatprep.subr.mxu0 0.0
    %212 = vmatpush1.xpose.msra.mxu0 0.0
    %213 = vmatprep.subr.mxu0 0.0
    %214 = vmatpush1.xpose.msra.mxu0 0.0
    %215 = vmatprep.subr.mxu0 0.0
    %216 = vmatpush1.xpose.msra.mxu0 0.0
    %217 = vmatprep.subr.mxu0 0.0
    %218 = vmatpush1.xpose.msra.mxu0 0.0
    %219 = vmatprep.subr.mxu0 0.0
    %220 = vmatpush1.xpose.msra.mxu0 0.0
    %221 = vmatprep.subr.mxu0 0.0
    %222 = vmatpush1.xpose.msra.mxu0 0.0
    %223 = vmatprep.subr.mxu0 0.0
    %224 = vmatpush1.xpose.msra.mxu0 0.0
    %225 = vmatprep.subr.mxu0 0.0
    %226 = vmatpush1.xpose.msra.mxu0 0.0
    %227 = vmatprep.subr.mxu0 0.0
    %228 = vmatpush1.xpose.msra.mxu0 0.0
    %229 = vmatprep.subr.mxu0 0.0
    %230 = vmatpush1.xpose.msra.mxu0 0.0
    %231 = vmatprep.subr.mxu0 0.0
    %232 = vmatpush1.xpose.msra.mxu0 0.0
    %233 = vmatprep.subr.mxu0 0.0
    %234 = vmatpush1.xpose.msra.mxu0 0.0
    %235 = vmatprep.subr.mxu0 0.0
    %236 = vmatpush1.xpose.msra.mxu0 0.0
    %237 = vmatprep.subr.mxu0 0.0
    %238 = vmatpush1.xpose.msra.mxu0 0.0
    %239 = vmatprep.subr.mxu0 0.0
    %240 = vmatpush1.xpose.msra.mxu0 0.0
    %241 = vmatprep.subr.mxu0 0.0
    %242 = vmatpush1.xpose.msra.mxu0 0.0
    %243 = vmatprep.subr.mxu0 0.0
    %244 = vmatpush1.xpose.msra.mxu0 0.0
    %245 = vmatprep.subr.mxu0 0.0
    %246 = vmatpush1.xpose.msra.mxu0 0.0
    %247 = vmatprep.subr.mxu0 0.0
    %248 = vmatpush1.xpose.msra.mxu0 0.0
    %249 = vmatprep.subr.mxu0 0.0
    %250 = vmatpush1.xpose.msra.mxu0 0.0
    %251 = vmatprep.subr.mxu0 0.0
    %252 = vmatpush1.xpose.msra.mxu0 0.0
    %253 = vmatprep.subr.mxu0 0.0
    %254 = vmatpush1.xpose.msra.mxu0 0.0
    %255 = vmatprep.mubr.f32.mxu0 0.0
    %256 = vmatmul.mubr.f32.gmra.mrb[0].mxu0 %v180
    %v257 = vpop.f32.mrb[0].mxu0
    %v258 = vadd.f32 0.0, %v257
    %v259 = vpop.f32.mrb[0].mxu0
    %260 = vmatprep.mubr.f32.mxu0 0.0
    %261 = vmatmul.mubr.f32.gmra.mrb[0].mxu0 %v183
    %v262 = vpop.f32.mrb[0].mxu0
    %v263 = vadd.f32 0.0, %v262
    %v264 = vpop.f32.mrb[0].mxu0
    %265 = vdwg.mxu0
    %v266 = vld [vmem:[%s1] sm:$0xff]
    %v267 = vld [vmem:[%s1 + $0x8] sm:$0xff]
    %v268 = vld [vmem:[#allocation9] sm:$0x1]
    %v269 = vld [vmem:[#allocation10] sm:$0x1]
    %v271 = vlaneseq
    %v272 = vshrl.u32 %v271, 7
    %v273 = vsub.s32 0, %v272
    %v274 = vrot.slane %v269, %v273
    %vm276 = vcmask 7168
    %v278 = vsel %vm276, %v266, 0
    %v281 = vsel %vm276, %v267, 0
    %vm283 = vcmask 1040384
    %v285 = vsel %vm283, %v268, 0
    %287 = vmatprep.subr.mxu0 0.0
    %288 = vmatpush1.msra.mxu0 %v285
    %289 = vmatprep.subr.mxu0 0.0
    %290 = vmatpush1.msra.mxu0 0.0
    %291 = vmatprep.subr.mxu0 0.0
    %292 = vmatpush1.msra.mxu0 0.0
    %293 = vmatprep.subr.mxu0 0.0
    %294 = vmatpush1.msra.mxu0 0.0
    %295 = vmatprep.subr.mxu0 0.0
    %296 = vmatpush1.msra.mxu0 0.0
    %297 = vmatprep.subr.mxu0 0.0
    %298 = vmatpush1.msra.mxu0 0.0
    %299 = vmatprep.subr.mxu0 0.0
    %300 = vmatpush1.msra.mxu0 0.0
    %301 = vmatprep.subr.mxu0 0.0
    %302 = vmatpush1.msra.mxu0 0.0
    %303 = vmatprep.subr.mxu0 0.0
    %304 = vmatpush1.msra.mxu0 0.0
    %305 = vmatprep.subr.mxu0 0.0
    %306 = vmatpush1.msra.mxu0 0.0
    %307 = vmatprep.subr.mxu0 0.0
    %308 = vmatpush1.msra.mxu0 0.0
    %309 = vmatprep.subr.mxu0 0.0
    %310 = vmatpush1.msra.mxu0 0.0
    %311 = vmatprep.subr.mxu0 0.0
    %312 = vmatpush1.msra.mxu0 0.0
    %313 = vmatprep.subr.mxu0 0.0
    %314 = vmatpush1.msra.mxu0 0.0
    %315 = vmatprep.subr.mxu0 0.0
    %316 = vmatpush1.msra.mxu0 0.0
    %317 = vmatprep.subr.mxu0 0.0
    %318 = vmatpush1.msra.mxu0 0.0
    %319 = vmatprep.subr.mxu0 0.0
    %320 = vmatpush1.msra.mxu0 0.0
    %321 = vmatprep.subr.mxu0 0.0
    %322 = vmatpush1.msra.mxu0 0.0
    %323 = vmatprep.subr.mxu0 0.0
    %324 = vmatpush1.msra.mxu0 0.0
    %325 = vmatprep.subr.mxu0 0.0
    %326 = vmatpush1.msra.mxu0 0.0
    %327 = vmatprep.subr.mxu0 0.0
    %328 = vmatpush1.msra.mxu0 0.0
    %329 = vmatprep.subr.mxu0 0.0
    %330 = vmatpush1.msra.mxu0 0.0
    %331 = vmatprep.subr.mxu0 0.0
    %332 = vmatpush1.msra.mxu0 0.0
    %333 = vmatprep.subr.mxu0 0.0
    %334 = vmatpush1.msra.mxu0 0.0
    %335 = vmatprep.subr.mxu0 0.0
    %336 = vmatpush1.msra.mxu0 0.0
    %337 = vmatprep.subr.mxu0 0.0
    %338 = vmatpush1.msra.mxu0 0.0
    %339 = vmatprep.subr.mxu0 0.0
    %340 = vmatpush1.msra.mxu0 0.0
    %341 = vmatprep.subr.mxu0 0.0
    %342 = vmatpush1.msra.mxu0 0.0
    %343 = vmatprep.subr.mxu0 0.0
    %344 = vmatpush1.msra.mxu0 0.0
    %345 = vmatprep.subr.mxu0 0.0
    %346 = vmatpush1.msra.mxu0 0.0
    %347 = vmatprep.subr.mxu0 0.0
    %348 = vmatpush1.msra.mxu0 0.0
    %349 = vmatprep.subr.mxu0 0.0
    %350 = vmatpush1.msra.mxu0 0.0
    %351 = vmatprep.mubr.f32.mxu0 0.0
    %352 = vmatmul.mubr.f32.gmra.mrb[0].mxu0 %v278
    %v353 = vpop.f32.mrb[0].mxu0
    %v354 = vadd.f32 %v274, %v353
    %v355 = vpop.f32.mrb[0].mxu0
    %356 = vmatprep.mubr.f32.mxu0 0.0
    %357 = vmatmul.mubr.f32.gmra.mrb[0].mxu0 %v281
    %v358 = vpop.f32.mrb[0].mxu0
    %v359 = vadd.f32 %v274, %v358
    %v360 = vpop.f32.mrb[0].mxu0
    %361 = vdwg.mxu0
    %v363 = vsel %vm158, %v258, 0
    %v366 = vsel %vm158, %v263, 0
    %368 = vmatprep.subr.mxu0 0.0
    %369 = vmatpush1.msra.mxu0 %v354
    %370 = vmatprep.subr.mxu0 0.0
    %371 = vmatpush1.msra.mxu0 %v359
    %372 = vmatprep.subr.mxu0 0.0
    %373 = vmatpush1.msra.mxu0 0.0
    %374 = vmatprep.subr.mxu0 0.0
    %375 = vmatpush1.msra.mxu0 0.0
    %376 = vmatprep.subr.mxu0 0.0
    %377 = vmatpush1.msra.mxu0 0.0
    %378 = vmatprep.subr.mxu0 0.0
    %379 = vmatpush1.msra.mxu0 0.0
    %380 = vmatprep.subr.mxu0 0.0
    %381 = vmatpush1.msra.mxu0 0.0
    %382 = vmatprep.subr.mxu0 0.0
    %383 = vmatpush1.msra.mxu0 0.0
    %384 = vmatprep.subr.mxu0 0.0
    %385 = vmatpush1.msra.mxu0 0.0
    %386 = vmatprep.subr.mxu0 0.0
    %387 = vmatpush1.msra.mxu0 0.0
    %388 = vmatprep.subr.mxu0 0.0
    %389 = vmatpush1.msra.mxu0 0.0
    %390 = vmatprep.subr.mxu0 0.0
    %391 = vmatpush1.msra.mxu0 0.0
    %392 = vmatprep.subr.mxu0 0.0
    %393 = vmatpush1.msra.mxu0 0.0
    %394 = vmatprep.subr.mxu0 0.0
    %395 = vmatpush1.msra.mxu0 0.0
    %396 = vmatprep.subr.mxu0 0.0
    %397 = vmatpush1.msra.mxu0 0.0
    %398 = vmatprep.subr.mxu0 0.0
    %399 = vmatpush1.msra.mxu0 0.0
    %400 = vmatprep.subr.mxu0 0.0
    %401 = vmatpush1.msra.mxu0 0.0
    %402 = vmatprep.subr.mxu0 0.0
    %403 = vmatpush1.msra.mxu0 0.0
    %404 = vmatprep.subr.mxu0 0.0
    %405 = vmatpush1.msra.mxu0 0.0
    %406 = vmatprep.subr.mxu0 0.0
    %407 = vmatpush1.msra.mxu0 0.0
    %408 = vmatprep.subr.mxu0 0.0
    %409 = vmatpush1.msra.mxu0 0.0
    %410 = vmatprep.subr.mxu0 0.0
    %411 = vmatpush1.msra.mxu0 0.0
    %412 = vmatprep.subr.mxu0 0.0
    %413 = vmatpush1.msra.mxu0 0.0
    %414 = vmatprep.subr.mxu0 0.0
    %415 = vmatpush1.msra.mxu0 0.0
    %416 = vmatprep.subr.mxu0 0.0
    %417 = vmatpush1.msra.mxu0 0.0
    %418 = vmatprep.subr.mxu0 0.0
    %419 = vmatpush1.msra.mxu0 0.0
    %420 = vmatprep.subr.mxu0 0.0
    %421 = vmatpush1.msra.mxu0 0.0
    %422 = vmatprep.subr.mxu0 0.0
    %423 = vmatpush1.msra.mxu0 0.0
    %424 = vmatprep.subr.mxu0 0.0
    %425 = vmatpush1.msra.mxu0 0.0
    %426 = vmatprep.subr.mxu0 0.0
    %427 = vmatpush1.msra.mxu0 0.0
    %428 = vmatprep.subr.mxu0 0.0
    %429 = vmatpush1.msra.mxu0 0.0
    %430 = vmatprep.subr.mxu0 0.0
    %431 = vmatpush1.msra.mxu0 0.0
    %432 = vmatprep.mubr.f32.mxu0 0.0
    %433 = vmatmul.mubr.f32.gmra.mrb[0].mxu0 %v363
    %v434 = vpop.f32.mrb[0].mxu0
    %v435 = vadd.f32 0.0, %v434
    %v436 = vpop.f32.mrb[0].mxu0
    %437 = vmatprep.mubr.f32.mxu0 0.0
    %438 = vmatmul.mubr.f32.gmra.mrb[0].mxu0 %v366
    %v439 = vpop.f32.mrb[0].mxu0
    %v440 = vadd.f32 0.0, %v439
    %v441 = vpop.f32.mrb[0].mxu0
    %442 = vdwg.mxu0
    %v443 = vld [vmem:[#allocation12] sm:$0xff]
    %v444 = vld [vmem:[#allocation13] sm:$0x1]
    %v446 = vlaneseq
    %v447 = vshrl.u32 %v446, 7
    %v448 = vsub.s32 0, %v447
    %v449 = vrot.slane %v444, %v448
    %vm451 = vcmask 64512
    %v453 = vsel %vm451, %v435, 0
    %v456 = vsel %vm451, %v440, 0
    %458 = vmatprep.subr.mxu0 0.0
    %459 = vmatpush1.msra.mxu0 %v443
    %460 = vmatprep.subr.mxu0 0.0
    %461 = vmatpush1.msra.mxu0 0.0
    %462 = vmatprep.subr.mxu0 0.0
    %463 = vmatpush1.msra.mxu0 0.0
    %464 = vmatprep.subr.mxu0 0.0
    %465 = vmatpush1.msra.mxu0 0.0
    %466 = vmatprep.subr.mxu0 0.0
    %467 = vmatpush1.msra.mxu0 0.0
    %468 = vmatprep.subr.mxu0 0.0
    %469 = vmatpush1.msra.mxu0 0.0
    %470 = vmatprep.subr.mxu0 0.0
    %471 = vmatpush1.msra.mxu0 0.0
    %472 = vmatprep.subr.mxu0 0.0
    %473 = vmatpush1.msra.mxu0 0.0
    %474 = vmatprep.subr.mxu0 0.0
    %475 = vmatpush1.msra.mxu0 0.0
    %476 = vmatprep.subr.mxu0 0.0
    %477 = vmatpush1.msra.mxu0 0.0
    %478 = vmatprep.subr.mxu0 0.0
    %479 = vmatpush1.msra.mxu0 0.0
    %480 = vmatprep.subr.mxu0 0.0
    %481 = vmatpush1.msra.mxu0 0.0
    %482 = vmatprep.subr.mxu0 0.0
    %483 = vmatpush1.msra.mxu0 0.0
    %484 = vmatprep.subr.mxu0 0.0
    %485 = vmatpush1.msra.mxu0 0.0
    %486 = vmatprep.subr.mxu0 0.0
    %487 = vmatpush1.msra.mxu0 0.0
    %488 = vmatprep.subr.mxu0 0.0
    %489 = vmatpush1.msra.mxu0 0.0
    %490 = vmatprep.subr.mxu0 0.0
    %491 = vmatpush1.msra.mxu0 0.0
    %492 = vmatprep.subr.mxu0 0.0
    %493 = vmatpush1.msra.mxu0 0.0
    %494 = vmatprep.subr.mxu0 0.0
    %495 = vmatpush1.msra.mxu0 0.0
    %496 = vmatprep.subr.mxu0 0.0
    %497 = vmatpush1.msra.mxu0 0.0
    %498 = vmatprep.subr.mxu0 0.0
    %499 = vmatpush1.msra.mxu0 0.0
    %500 = vmatprep.subr.mxu0 0.0
    %501 = vmatpush1.msra.mxu0 0.0
    %502 = vmatprep.subr.mxu0 0.0
    %503 = vmatpush1.msra.mxu0 0.0
    %504 = vmatprep.subr.mxu0 0.0
    %505 = vmatpush1.msra.mxu0 0.0
    %506 = vmatprep.subr.mxu0 0.0
    %507 = vmatpush1.msra.mxu0 0.0
    %508 = vmatprep.subr.mxu0 0.0
    %509 = vmatpush1.msra.mxu0 0.0
    %510 = vmatprep.subr.mxu0 0.0
    %511 = vmatpush1.msra.mxu0 0.0
    %512 = vmatprep.subr.mxu0 0.0
    %513 = vmatpush1.msra.mxu0 0.0
    %514 = vmatprep.subr.mxu0 0.0
    %515 = vmatpush1.msra.mxu0 0.0
    %516 = vmatprep.subr.mxu0 0.0
    %517 = vmatpush1.msra.mxu0 0.0
    %518 = vmatprep.subr.mxu0 0.0
    %519 = vmatpush1.msra.mxu0 0.0
    %520 = vmatprep.subr.mxu0 0.0
    %521 = vmatpush1.msra.mxu0 0.0
    %522 = vmatprep.mubr.f32.mxu0 0.0
    %523 = vmatmul.mubr.f32.gmra.mrb[0].mxu0 %v453
    %v524 = vpop.f32.mrb[0].mxu0
    %v525 = vadd.f32 %v449, %v524
    %v526 = vpop.f32.mrb[0].mxu0
    %527 = vmatprep.mubr.f32.mxu0 0.0
    %528 = vmatmul.mubr.f32.gmra.mrb[0].mxu0 %v456
    %v529 = vpop.f32.mrb[0].mxu0
    %v530 = vadd.f32 %v449, %v529
    %v531 = vpop.f32.mrb[0].mxu0
    %532 = vdwg.mxu0
    %533 = vmatprep.subr.mxu0 0.0
    %534 = vmatpush1.msra.mxu0 %v525
    %535 = vmatprep.subr.mxu0 0.0
    %536 = vmatpush1.msra.mxu0 %v530
    %537 = vmatprep.subr.mxu0 0.0
    %538 = vmatpush1.msra.mxu0 0.0
    %539 = vmatprep.subr.mxu0 0.0
    %540 = vmatpush1.msra.mxu0 0.0
    %541 = vmatprep.subr.mxu0 0.0
    %542 = vmatpush1.msra.mxu0 0.0
    %543 = vmatprep.subr.mxu0 0.0
    %544 = vmatpush1.msra.mxu0 0.0
    %545 = vmatprep.subr.mxu0 0.0
    %546 = vmatpush1.msra.mxu0 0.0
    %547 = vmatprep.subr.mxu0 0.0
    %548 = vmatpush1.msra.mxu0 0.0
    %549 = vmatprep.subr.mxu0 0.0
    %550 = vmatpush1.msra.mxu0 0.0
    %551 = vmatprep.subr.mxu0 0.0
    %552 = vmatpush1.msra.mxu0 0.0
    %553 = vmatprep.subr.mxu0 0.0
    %554 = vmatpush1.msra.mxu0 0.0
    %555 = vmatprep.subr.mxu0 0.0
    %556 = vmatpush1.msra.mxu0 0.0
    %557 = vmatprep.subr.mxu0 0.0
    %558 = vmatpush1.msra.mxu0 0.0
    %559 = vmatprep.subr.mxu0 0.0
    %560 = vmatpush1.msra.mxu0 0.0
    %561 = vmatprep.subr.mxu0 0.0
    %562 = vmatpush1.msra.mxu0 0.0
    %563 = vmatprep.subr.mxu0 0.0
    %564 = vmatpush1.msra.mxu0 0.0
    %565 = vmatprep.subr.mxu0 0.0
    %566 = vmatpush1.msra.mxu0 0.0
    %567 = vmatprep.subr.mxu0 0.0
    %568 = vmatpush1.msra.mxu0 0.0
    %569 = vmatprep.subr.mxu0 0.0
    %570 = vmatpush1.msra.mxu0 0.0
    %571 = vmatprep.subr.mxu0 0.0
    %572 = vmatpush1.msra.mxu0 0.0
    %573 = vmatprep.subr.mxu0 0.0
    %574 = vmatpush1.msra.mxu0 0.0
    %575 = vmatprep.subr.mxu0 0.0
    %576 = vmatpush1.msra.mxu0 0.0
    %577 = vmatprep.subr.mxu0 0.0
    %578 = vmatpush1.msra.mxu0 0.0
    %579 = vmatprep.subr.mxu0 0.0
    %580 = vmatpush1.msra.mxu0 0.0
    %581 = vmatprep.subr.mxu0 0.0
    %582 = vmatpush1.msra.mxu0 0.0
    %583 = vmatprep.subr.mxu0 0.0
    %584 = vmatpush1.msra.mxu0 0.0
    %585 = vmatprep.subr.mxu0 0.0
    %586 = vmatpush1.msra.mxu0 0.0
    %587 = vmatprep.subr.mxu0 0.0
    %588 = vmatpush1.msra.mxu0 0.0
    %589 = vmatprep.subr.mxu0 0.0
    %590 = vmatpush1.msra.mxu0 0.0
    %591 = vmatprep.subr.mxu0 0.0
    %592 = vmatpush1.msra.mxu0 0.0
    %593 = vmatprep.subr.mxu0 0.0
    %594 = vmatpush1.msra.mxu0 0.0
    %595 = vmatprep.subr.mxu0 0.0
    %596 = vmatpush1.msra.mxu0 0.0
    %597 = vmatprep.mubr.f32.mxu0 0.0
    %598 = vmatmul.mubr.f32.gmra.mrb[0].mxu0 %v363
    %v599 = vpop.f32.mrb[0].mxu0
    %v600 = vadd.f32 0.0, %v599
    %v601 = vpop.f32.mrb[0].mxu0
    %602 = vmatprep.mubr.f32.mxu0 0.0
    %603 = vmatmul.mubr.f32.gmra.mrb[0].mxu0 %v366
    %v604 = vpop.f32.mrb[0].mxu0
    %v605 = vadd.f32 0.0, %v604
    %v606 = vpop.f32.mrb[0].mxu0
    %607 = vdwg.mxu0
    %v608 = vld [vmem:[%s7] sm:$0xff]
    %v609 = vld [vmem:[#allocation2] sm:$0x1]
    %v611 = vlaneseq
    %v612 = vshrl.u32 %v611, 7
    %v613 = vsub.s32 0, %v612
    %v614 = vrot.slane %v609, %v613
    %v617 = vsel %vm451, %v600, 0
    %v620 = vsel %vm451, %v605, 0
    %622 = vmatprep.subr.mxu0 0.0
    %623 = vmatpush1.msra.mxu0 %v608
    %624 = vmatprep.subr.mxu0 0.0
    %625 = vmatpush1.msra.mxu0 0.0
    %626 = vmatprep.subr.mxu0 0.0
    %627 = vmatpush1.msra.mxu0 0.0
    %628 = vmatprep.subr.mxu0 0.0
    %629 = vmatpush1.msra.mxu0 0.0
    %630 = vmatprep.subr.mxu0 0.0
    %631 = vmatpush1.msra.mxu0 0.0
    %632 = vmatprep.subr.mxu0 0.0
    %633 = vmatpush1.msra.mxu0 0.0
    %634 = vmatprep.subr.mxu0 0.0
    %635 = vmatpush1.msra.mxu0 0.0
    %636 = vmatprep.subr.mxu0 0.0
    %637 = vmatpush1.msra.mxu0 0.0
    %638 = vmatprep.subr.mxu0 0.0
    %639 = vmatpush1.msra.mxu0 0.0
    %640 = vmatprep.subr.mxu0 0.0
    %641 = vmatpush1.msra.mxu0 0.0
    %642 = vmatprep.subr.mxu0 0.0
    %643 = vmatpush1.msra.mxu0 0.0
    %644 = vmatprep.subr.mxu0 0.0
    %645 = vmatpush1.msra.mxu0 0.0
    %646 = vmatprep.subr.mxu0 0.0
    %647 = vmatpush1.msra.mxu0 0.0
    %648 = vmatprep.subr.mxu0 0.0
    %649 = vmatpush1.msra.mxu0 0.0
    %650 = vmatprep.subr.mxu0 0.0
    %651 = vmatpush1.msra.mxu0 0.0
    %652 = vmatprep.subr.mxu0 0.0
    %653 = vmatpush1.msra.mxu0 0.0
    %654 = vmatprep.subr.mxu0 0.0
    %655 = vmatpush1.msra.mxu0 0.0
    %656 = vmatprep.subr.mxu0 0.0
    %657 = vmatpush1.msra.mxu0 0.0
    %658 = vmatprep.subr.mxu0 0.0
    %659 = vmatpush1.msra.mxu0 0.0
    %660 = vmatprep.subr.mxu0 0.0
    %661 = vmatpush1.msra.mxu0 0.0
    %662 = vmatprep.subr.mxu0 0.0
    %663 = vmatpush1.msra.mxu0 0.0
    %664 = vmatprep.subr.mxu0 0.0
    %665 = vmatpush1.msra.mxu0 0.0
    %666 = vmatprep.subr.mxu0 0.0
    %667 = vmatpush1.msra.mxu0 0.0
    %668 = vmatprep.subr.mxu0 0.0
    %669 = vmatpush1.msra.mxu0 0.0
    %670 = vmatprep.subr.mxu0 0.0
    %671 = vmatpush1.msra.mxu0 0.0
    %672 = vmatprep.subr.mxu0 0.0
    %673 = vmatpush1.msra.mxu0 0.0
    %674 = vmatprep.subr.mxu0 0.0
    %675 = vmatpush1.msra.mxu0 0.0
    %676 = vmatprep.subr.mxu0 0.0
    %677 = vmatpush1.msra.mxu0 0.0
    %678 = vmatprep.subr.mxu0 0.0
    %679 = vmatpush1.msra.mxu0 0.0
    %680 = vmatprep.subr.mxu0 0.0
    %681 = vmatpush1.msra.mxu0 0.0
    %682 = vmatprep.subr.mxu0 0.0
    %683 = vmatpush1.msra.mxu0 0.0
    %684 = vmatprep.subr.mxu0 0.0
    %685 = vmatpush1.msra.mxu0 0.0
    %686 = vmatprep.mubr.f32.mxu0 0.0
    %687 = vmatmul.mubr.f32.gmra.mrb[0].mxu0 %v617
    %v688 = vpop.f32.mrb[0].mxu0
    %v689 = vadd.f32 %v614, %v688
    %v690 = vpop.f32.mrb[0].mxu0
    %691 = vmatprep.mubr.f32.mxu0 0.0
    %692 = vmatmul.mubr.f32.gmra.mrb[0].mxu0 %v620
    %v693 = vpop.f32.mrb[0].mxu0
    %v694 = vadd.f32 %v614, %v693
    %v695 = vpop.f32.mrb[0].mxu0
    %696 = vdwg.mxu0
    %v697 = vld [vmem:[#allocation4] sm:$0xff]
    %v698 = vld [vmem:[#allocation4 + $0x8] sm:$0xff]
    %v699 = vld [vmem:[#allocation15] sm:$0xff]
    %v700 = vld [vmem:[#allocation15 + $0x8] sm:$0xff]
    %v701 = vld [vmem:[%s10] sm:$0x1]
    %v703 = vlaneseq
    %v704 = vshrl.u32 %v703, 7
    %v705 = vsub.s32 0, %v704
    %v706 = vrot.slane %v701, %v705
    %v709 = vsel %vm158, %v697, 0
    %v712 = vsel %vm158, %v698, 0
    %714 = vmatprep.subr.mxu0 0.0
    %715 = vmatpush1.msra.mxu0 %v699
    %716 = vmatprep.subr.mxu0 0.0
    %717 = vmatpush1.msra.mxu0 %v700
    %718 = vmatprep.subr.mxu0 0.0
    %719 = vmatpush1.msra.mxu0 0.0
    %720 = vmatprep.subr.mxu0 0.0
    %721 = vmatpush1.msra.mxu0 0.0
    %722 = vmatprep.subr.mxu0 0.0
    %723 = vmatpush1.msra.mxu0 0.0
    %724 = vmatprep.subr.mxu0 0.0
    %725 = vmatpush1.msra.mxu0 0.0
    %726 = vmatprep.subr.mxu0 0.0
    %727 = vmatpush1.msra.mxu0 0.0
    %728 = vmatprep.subr.mxu0 0.0
    %729 = vmatpush1.msra.mxu0 0.0
    %730 = vmatprep.subr.mxu0 0.0
    %731 = vmatpush1.msra.mxu0 0.0
    %732 = vmatprep.subr.mxu0 0.0
    %733 = vmatpush1.msra.mxu0 0.0
    %734 = vmatprep.subr.mxu0 0.0
    %735 = vmatpush1.msra.mxu0 0.0
    %736 = vmatprep.subr.mxu0 0.0
    %737 = vmatpush1.msra.mxu0 0.0
    %738 = vmatprep.subr.mxu0 0.0
    %739 = vmatpush1.msra.mxu0 0.0
    %740 = vmatprep.subr.mxu0 0.0
    %741 = vmatpush1.msra.mxu0 0.0
    %742 = vmatprep.subr.mxu0 0.0
    %743 = vmatpush1.msra.mxu0 0.0
    %744 = vmatprep.subr.mxu0 0.0
    %745 = vmatpush1.msra.mxu0 0.0
    %746 = vmatprep.subr.mxu0 0.0
    %747 = vmatpush1.msra.mxu0 0.0
    %748 = vmatprep.subr.mxu0 0.0
    %749 = vmatpush1.msra.mxu0 0.0
    %750 = vmatprep.subr.mxu0 0.0
    %751 = vmatpush1.msra.mxu0 0.0
    %752 = vmatprep.subr.mxu0 0.0
    %753 = vmatpush1.msra.mxu0 0.0
    %754 = vmatprep.subr.mxu0 0.0
    %755 = vmatpush1.msra.mxu0 0.0
    %756 = vmatprep.subr.mxu0 0.0
    %757 = vmatpush1.msra.mxu0 0.0
    %758 = vmatprep.subr.mxu0 0.0
    %759 = vmatpush1.msra.mxu0 0.0
    %760 = vmatprep.subr.mxu0 0.0
    %761 = vmatpush1.msra.mxu0 0.0
    %762 = vmatprep.subr.mxu0 0.0
    %763 = vmatpush1.msra.mxu0 0.0
    %764 = vmatprep.subr.mxu0 0.0
    %765 = vmatpush1.msra.mxu0 0.0
    %766 = vmatprep.subr.mxu0 0.0
    %767 = vmatpush1.msra.mxu0 0.0
    %768 = vmatprep.subr.mxu0 0.0
    %769 = vmatpush1.msra.mxu0 0.0
    %770 = vmatprep.subr.mxu0 0.0
    %771 = vmatpush1.msra.mxu0 0.0
    %772 = vmatprep.subr.mxu0 0.0
    %773 = vmatpush1.msra.mxu0 0.0
    %774 = vmatprep.subr.mxu0 0.0
    %775 = vmatpush1.msra.mxu0 0.0
    %776 = vmatprep.subr.mxu0 0.0
    %777 = vmatpush1.msra.mxu0 0.0
    %778 = vmatprep.mubr.f32.mxu0 0.0
    %779 = vmatmul.mubr.f32.gmra.mrb[0].mxu0 %v709
    %v780 = vpop.f32.mrb[0].mxu0
    %v781 = vadd.f32 %v706, %v780
    %v782 = vpop.f32.mrb[0].mxu0
    %783 = vmatprep.mubr.f32.mxu0 0.0
    %784 = vmatmul.mubr.f32.gmra.mrb[0].mxu0 %v712
    %v785 = vpop.f32.mrb[0].mxu0
    %v786 = vadd.f32 %v706, %v785
    %v787 = vpop.f32.mrb[0].mxu0
    %788 = vdwg.mxu0
    %789 = vmatprep.subr.mxu0 0.0
    %790 = vmatpush1.msra.mxu0 %v781
    %791 = vmatprep.subr.mxu0 0.0
    %792 = vmatpush1.msra.mxu0 %v786
    %793 = vmatprep.subr.mxu0 0.0
    %794 = vmatpush1.msra.mxu0 0.0
    %795 = vmatprep.subr.mxu0 0.0
    %796 = vmatpush1.msra.mxu0 0.0
    %797 = vmatprep.subr.mxu0 0.0
    %798 = vmatpush1.msra.mxu0 0.0
    %799 = vmatprep.subr.mxu0 0.0
    %800 = vmatpush1.msra.mxu0 0.0
    %801 = vmatprep.subr.mxu0 0.0
    %802 = vmatpush1.msra.mxu0 0.0
    %803 = vmatprep.subr.mxu0 0.0
    %804 = vmatpush1.msra.mxu0 0.0
    %805 = vmatprep.subr.mxu0 0.0
    %806 = vmatpush1.msra.mxu0 0.0
    %807 = vmatprep.subr.mxu0 0.0
    %808 = vmatpush1.msra.mxu0 0.0
    %809 = vmatprep.subr.mxu0 0.0
    %810 = vmatpush1.msra.mxu0 0.0
    %811 = vmatprep.subr.mxu0 0.0
    %812 = vmatpush1.msra.mxu0 0.0
    %813 = vmatprep.subr.mxu0 0.0
    %814 = vmatpush1.msra.mxu0 0.0
    %815 = vmatprep.subr.mxu0 0.0
    %816 = vmatpush1.msra.mxu0 0.0
    %817 = vmatprep.subr.mxu0 0.0
    %818 = vmatpush1.msra.mxu0 0.0
    %819 = vmatprep.subr.mxu0 0.0
    %820 = vmatpush1.msra.mxu0 0.0
    %821 = vmatprep.subr.mxu0 0.0
    %822 = vmatpush1.msra.mxu0 0.0
    %823 = vmatprep.subr.mxu0 0.0
    %824 = vmatpush1.msra.mxu0 0.0
    %825 = vmatprep.subr.mxu0 0.0
    %826 = vmatpush1.msra.mxu0 0.0
    %827 = vmatprep.subr.mxu0 0.0
    %828 = vmatpush1.msra.mxu0 0.0
    %829 = vmatprep.subr.mxu0 0.0
    %830 = vmatpush1.msra.mxu0 0.0
    %831 = vmatprep.subr.mxu0 0.0
    %832 = vmatpush1.msra.mxu0 0.0
    %833 = vmatprep.subr.mxu0 0.0
    %834 = vmatpush1.msra.mxu0 0.0
    %835 = vmatprep.subr.mxu0 0.0
    %836 = vmatpush1.msra.mxu0 0.0
    %837 = vmatprep.subr.mxu0 0.0
    %838 = vmatpush1.msra.mxu0 0.0
    %839 = vmatprep.subr.mxu0 0.0
    %840 = vmatpush1.msra.mxu0 0.0
    %841 = vmatprep.subr.mxu0 0.0
    %842 = vmatpush1.msra.mxu0 0.0
    %843 = vmatprep.subr.mxu0 0.0
    %844 = vmatpush1.msra.mxu0 0.0
    %845 = vmatprep.subr.mxu0 0.0
    %846 = vmatpush1.msra.mxu0 0.0
    %847 = vmatprep.subr.mxu0 0.0
    %848 = vmatpush1.msra.mxu0 0.0
    %849 = vmatprep.subr.mxu0 0.0
    %850 = vmatpush1.msra.mxu0 0.0
    %851 = vmatprep.subr.mxu0 0.0
    %852 = vmatpush1.msra.mxu0 0.0
    %853 = vmatprep.mubr.f32.mxu0 0.0
    %854 = vmatmul.mubr.f32.gmra.mrb[0].mxu0 %v363
    %v855 = vpop.f32.mrb[0].mxu0
    %v856 = vadd.f32 0.0, %v855
    %v857 = vpop.f32.mrb[0].mxu0
    %858 = vmatprep.mubr.f32.mxu0 0.0
    %859 = vmatmul.mubr.f32.gmra.mrb[0].mxu0 %v366
    %v860 = vpop.f32.mrb[0].mxu0
    %v861 = vadd.f32 0.0, %v860
    %v862 = vpop.f32.mrb[0].mxu0
    %863 = vdwg.mxu0
    %v864 = vld [vmem:[%s11] sm:$0xff]
    %v865 = vld [vmem:[%s11 + $0x8] sm:$0xff]
    %v866 = vld [vmem:[%s11 + $0x10] sm:$0xff]
    %v867 = vld [vmem:[%s11 + $0x18] sm:$0xff]
    %v868 = vld [vmem:[%s12] sm:$0x1]
    %v870 = vlaneseq
    %v871 = vshrl.u32 %v870, 7
    %v872 = vsub.s32 0, %v871
    %v873 = vrot.slane %v868, %v872
    %vm875 = vcmask 261120
    %v877 = vsel %vm875, %v856, 0
    %v880 = vsel %vm875, %v861, 0
    %882 = vmatprep.subr.mxu0 0.0
    %883 = vmatpush1.msra.mxu0 %v864
    %884 = vmatprep.subr.mxu0 0.0
    %885 = vmatpush1.msra.mxu0 %v865
    %886 = vmatprep.subr.mxu0 0.0
    %887 = vmatpush1.msra.mxu0 %v866
    %888 = vmatprep.subr.mxu0 0.0
    %889 = vmatpush1.msra.mxu0 %v867
    %890 = vmatprep.subr.mxu0 0.0
    %891 = vmatpush1.msra.mxu0 0.0
    %892 = vmatprep.subr.mxu0 0.0
    %893 = vmatpush1.msra.mxu0 0.0
    %894 = vmatprep.subr.mxu0 0.0
    %895 = vmatpush1.msra.mxu0 0.0
    %896 = vmatprep.subr.mxu0 0.0
    %897 = vmatpush1.msra.mxu0 0.0
    %898 = vmatprep.subr.mxu0 0.0
    %899 = vmatpush1.msra.mxu0 0.0
    %900 = vmatprep.subr.mxu0 0.0
    %901 = vmatpush1.msra.mxu0 0.0
    %902 = vmatprep.subr.mxu0 0.0
    %903 = vmatpush1.msra.mxu0 0.0
    %904 = vmatprep.subr.mxu0 0.0
    %905 = vmatpush1.msra.mxu0 0.0
    %906 = vmatprep.subr.mxu0 0.0
    %907 = vmatpush1.msra.mxu0 0.0
    %908 = vmatprep.subr.mxu0 0.0
    %909 = vmatpush1.msra.mxu0 0.0
    %910 = vmatprep.subr.mxu0 0.0
    %911 = vmatpush1.msra.mxu0 0.0
    %912 = vmatprep.subr.mxu0 0.0
    %913 = vmatpush1.msra.mxu0 0.0
    %914 = vmatprep.subr.mxu0 0.0
    %915 = vmatpush1.msra.mxu0 0.0
    %916 = vmatprep.subr.mxu0 0.0
    %917 = vmatpush1.msra.mxu0 0.0
    %918 = vmatprep.subr.mxu0 0.0
    %919 = vmatpush1.msra.mxu0 0.0
    %920 = vmatprep.subr.mxu0 0.0
    %921 = vmatpush1.msra.mxu0 0.0
    %922 = vmatprep.subr.mxu0 0.0
    %923 = vmatpush1.msra.mxu0 0.0
    %924 = vmatprep.subr.mxu0 0.0
    %925 = vmatpush1.msra.mxu0 0.0
    %926 = vmatprep.subr.mxu0 0.0
    %927 = vmatpush1.msra.mxu0 0.0
    %928 = vmatprep.subr.mxu0 0.0
    %929 = vmatpush1.msra.mxu0 0.0
    %930 = vmatprep.subr.mxu0 0.0
    %931 = vmatpush1.msra.mxu0 0.0
    %932 = vmatprep.subr.mxu0 0.0
    %933 = vmatpush1.msra.mxu0 0.0
    %934 = vmatprep.subr.mxu0 0.0
    %935 = vmatpush1.msra.mxu0 0.0
    %936 = vmatprep.subr.mxu0 0.0
    %937 = vmatpush1.msra.mxu0 0.0
    %938 = vmatprep.subr.mxu0 0.0
    %939 = vmatpush1.msra.mxu0 0.0
    %940 = vmatprep.subr.mxu0 0.0
    %941 = vmatpush1.msra.mxu0 0.0
    %942 = vmatprep.subr.mxu0 0.0
    %943 = vmatpush1.msra.mxu0 0.0
    %944 = vmatprep.subr.mxu0 0.0
    %945 = vmatpush1.msra.mxu0 0.0
    %946 = vmatprep.mubr.f32.mxu0 0.0
    %947 = vmatmul.mubr.f32.gmra.mrb[0].mxu0 %v877
    %v948 = vpop.f32.mrb[0].mxu0
    %v949 = vadd.f32 %v873, %v948
    %v950 = vpop.f32.mrb[0].mxu0
    %951 = vmatprep.mubr.f32.mxu0 0.0
    %952 = vmatmul.mubr.f32.gmra.mrb[0].mxu0 %v880
    %v953 = vpop.f32.mrb[0].mxu0
    %v954 = vadd.f32 %v873, %v953
    %v955 = vpop.f32.mrb[0].mxu0
    %956 = vdwg.mxu0
    %957 = vmatprep.subr.mxu0 0.0
    %958 = vmatpush1.msra.mxu0 %v949
    %959 = vmatprep.subr.mxu0 0.0
    %960 = vmatpush1.msra.mxu0 %v954
    %961 = vmatprep.subr.mxu0 0.0
    %962 = vmatpush1.msra.mxu0 0.0
    %963 = vmatprep.subr.mxu0 0.0
    %964 = vmatpush1.msra.mxu0 0.0
    %965 = vmatprep.subr.mxu0 0.0
    %966 = vmatpush1.msra.mxu0 0.0
    %967 = vmatprep.subr.mxu0 0.0
    %968 = vmatpush1.msra.mxu0 0.0
    %969 = vmatprep.subr.mxu0 0.0
    %970 = vmatpush1.msra.mxu0 0.0
    %971 = vmatprep.subr.mxu0 0.0
    %972 = vmatpush1.msra.mxu0 0.0
    %973 = vmatprep.subr.mxu0 0.0
    %974 = vmatpush1.msra.mxu0 0.0
    %975 = vmatprep.subr.mxu0 0.0
    %976 = vmatpush1.msra.mxu0 0.0
    %977 = vmatprep.subr.mxu0 0.0
    %978 = vmatpush1.msra.mxu0 0.0
    %979 = vmatprep.subr.mxu0 0.0
    %980 = vmatpush1.msra.mxu0 0.0
    %981 = vmatprep.subr.mxu0 0.0
    %982 = vmatpush1.msra.mxu0 0.0
    %983 = vmatprep.subr.mxu0 0.0
    %984 = vmatpush1.msra.mxu0 0.0
    %985 = vmatprep.subr.mxu0 0.0
    %986 = vmatpush1.msra.mxu0 0.0
    %987 = vmatprep.subr.mxu0 0.0
    %988 = vmatpush1.msra.mxu0 0.0
    %989 = vmatprep.subr.mxu0 0.0
    %990 = vmatpush1.msra.mxu0 0.0
    %991 = vmatprep.subr.mxu0 0.0
    %992 = vmatpush1.msra.mxu0 0.0
    %993 = vmatprep.subr.mxu0 0.0
    %994 = vmatpush1.msra.mxu0 0.0
    %995 = vmatprep.subr.mxu0 0.0
    %996 = vmatpush1.msra.mxu0 0.0
    %997 = vmatprep.subr.mxu0 0.0
    %998 = vmatpush1.msra.mxu0 0.0
    %999 = vmatprep.subr.mxu0 0.0
    %1000 = vmatpush1.msra.mxu0 0.0
    %1001 = vmatprep.subr.mxu0 0.0
    %1002 = vmatpush1.msra.mxu0 0.0
    %1003 = vmatprep.subr.mxu0 0.0
    %1004 = vmatpush1.msra.mxu0 0.0
    %1005 = vmatprep.subr.mxu0 0.0
    %1006 = vmatpush1.msra.mxu0 0.0
    %1007 = vmatprep.subr.mxu0 0.0
    %1008 = vmatpush1.msra.mxu0 0.0
    %1009 = vmatprep.subr.mxu0 0.0
    %1010 = vmatpush1.msra.mxu0 0.0
    %1011 = vmatprep.subr.mxu0 0.0
    %1012 = vmatpush1.msra.mxu0 0.0
    %1013 = vmatprep.subr.mxu0 0.0
    %1014 = vmatpush1.msra.mxu0 0.0
    %1015 = vmatprep.subr.mxu0 0.0
    %1016 = vmatpush1.msra.mxu0 0.0
    %1017 = vmatprep.subr.mxu0 0.0
    %1018 = vmatpush1.msra.mxu0 0.0
    %1019 = vmatprep.subr.mxu0 0.0
    %1020 = vmatpush1.msra.mxu0 0.0
    %1021 = vmatprep.mubr.f32.mxu0 0.0
    %1022 = vmatmul.mubr.f32.gmra.mrb[0].mxu0 %v363
    %v1023 = vpop.f32.mrb[0].mxu0
    %v1024 = vadd.f32 0.0, %v1023
    %v1025 = vpop.f32.mrb[0].mxu0
    %1026 = vmatprep.mubr.f32.mxu0 0.0
    %1027 = vmatmul.mubr.f32.gmra.mrb[0].mxu0 %v366
    %v1028 = vpop.f32.mrb[0].mxu0
    %v1029 = vadd.f32 0.0, %v1028
    %v1030 = vpop.f32.mrb[0].mxu0
    %1031 = vdwg.mxu0
    %1033 = vset.pattern.permute.xlu0 0
    %1034 = vperm.xlu0 %1033, %v689
    %v1035 = vpop.permute.xlu0 %1034
    %1038 = vset.pattern.permute.xlu0 0
    %1039 = vperm.xlu0 %1038, %v694
    %v1040 = vpop.permute.xlu0 %1039
    %v1042 = vmul.f32 %v1024, %v1035
    %v1043 = vmul.f32 %v1029, %v1040
    %v1044 = vld [vmem:[%s13] sm:$0xff]
    %v1045 = vld [vmem:[%s13 + $0x8] sm:$0xff]
    %v1046 = vld [vmem:[%s13 + $0x10] sm:$0xff]
    %v1047 = vld [vmem:[%s13 + $0x18] sm:$0xff]
    %v1048 = vld [vmem:[%s14] sm:$0x1]
    %v1050 = vlaneseq
    %v1051 = vshrl.u32 %v1050, 7
    %v1052 = vsub.s32 0, %v1051
    %v1053 = vrot.slane %v1048, %v1052
    %v1056 = vsel %vm875, %v1042, 0
    %v1059 = vsel %vm875, %v1043, 0
    %1061 = vmatprep.subr.mxu0 0.0
    %1062 = vmatpush1.msra.mxu0 %v1044
    %1063 = vmatprep.subr.mxu0 0.0
    %1064 = vmatpush1.msra.mxu0 %v1045
    %1065 = vmatprep.subr.mxu0 0.0
    %1066 = vmatpush1.msra.mxu0 %v1046
    %1067 = vmatprep.subr.mxu0 0.0
    %1068 = vmatpush1.msra.mxu0 %v1047
    %1069 = vmatprep.subr.mxu0 0.0
    %1070 = vmatpush1.msra.mxu0 0.0
    %1071 = vmatprep.subr.mxu0 0.0
    %1072 = vmatpush1.msra.mxu0 0.0
    %1073 = vmatprep.subr.mxu0 0.0
    %1074 = vmatpush1.msra.mxu0 0.0
    %1075 = vmatprep.subr.mxu0 0.0
    %1076 = vmatpush1.msra.mxu0 0.0
    %1077 = vmatprep.subr.mxu0 0.0
    %1078 = vmatpush1.msra.mxu0 0.0
    %1079 = vmatprep.subr.mxu0 0.0
    %1080 = vmatpush1.msra.mxu0 0.0
    %1081 = vmatprep.subr.mxu0 0.0
    %1082 = vmatpush1.msra.mxu0 0.0
    %1083 = vmatprep.subr.mxu0 0.0
    %1084 = vmatpush1.msra.mxu0 0.0
    %1085 = vmatprep.subr.mxu0 0.0
    %1086 = vmatpush1.msra.mxu0 0.0
    %1087 = vmatprep.subr.mxu0 0.0
    %1088 = vmatpush1.msra.mxu0 0.0
    %1089 = vmatprep.subr.mxu0 0.0
    %1090 = vmatpush1.msra.mxu0 0.0
    %1091 = vmatprep.subr.mxu0 0.0
    %1092 = vmatpush1.msra.mxu0 0.0
    %1093 = vmatprep.subr.mxu0 0.0
    %1094 = vmatpush1.msra.mxu0 0.0
    %1095 = vmatprep.subr.mxu0 0.0
    %1096 = vmatpush1.msra.mxu0 0.0
    %1097 = vmatprep.subr.mxu0 0.0
    %1098 = vmatpush1.msra.mxu0 0.0
    %1099 = vmatprep.subr.mxu0 0.0
    %1100 = vmatpush1.msra.mxu0 0.0
    %1101 = vmatprep.subr.mxu0 0.0
    %1102 = vmatpush1.msra.mxu0 0.0
    %1103 = vmatprep.subr.mxu0 0.0
    %1104 = vmatpush1.msra.mxu0 0.0
    %1105 = vmatprep.subr.mxu0 0.0
    %1106 = vmatpush1.msra.mxu0 0.0
    %1107 = vmatprep.subr.mxu0 0.0
    %1108 = vmatpush1.msra.mxu0 0.0
    %1109 = vmatprep.subr.mxu0 0.0
    %1110 = vmatpush1.msra.mxu0 0.0
    %1111 = vmatprep.subr.mxu0 0.0
    %1112 = vmatpush1.msra.mxu0 0.0
    %1113 = vmatprep.subr.mxu0 0.0
    %1114 = vmatpush1.msra.mxu0 0.0
    %1115 = vmatprep.subr.mxu0 0.0
    %1116 = vmatpush1.msra.mxu0 0.0
    %1117 = vmatprep.subr.mxu0 0.0
    %1118 = vmatpush1.msra.mxu0 0.0
    %1119 = vmatprep.subr.mxu0 0.0
    %1120 = vmatpush1.msra.mxu0 0.0
    %1121 = vmatprep.subr.mxu0 0.0
    %1122 = vmatpush1.msra.mxu0 0.0
    %1123 = vmatprep.subr.mxu0 0.0
    %1124 = vmatpush1.msra.mxu0 0.0
    %1125 = vmatprep.mubr.f32.mxu0 0.0
    %1126 = vmatmul.mubr.f32.gmra.mrb[0].mxu0 %v1056
    %v1127 = vpop.f32.mrb[0].mxu0
    %v1128 = vadd.f32 %v1053, %v1127
    %v1129 = vpop.f32.mrb[0].mxu0
    %1130 = vmatprep.mubr.f32.mxu0 0.0
    %1131 = vmatmul.mubr.f32.gmra.mrb[0].mxu0 %v1059
    %v1132 = vpop.f32.mrb[0].mxu0
    %v1133 = vadd.f32 %v1053, %v1132
    %v1134 = vpop.f32.mrb[0].mxu0
    %1135 = vdwg.mxu0
    %v1136 = vld [vmem:[%s15] sm:$0xff]
    %v1137 = vld [vmem:[%s15 + $0x8] sm:$0xff]
    %v1138 = vld [vmem:[%s15 + $0x10] sm:$0xff]
    %v1139 = vld [vmem:[%s15 + $0x18] sm:$0xff]
    %v1140 = vld [vmem:[%s16] sm:$0x1]
    %v1142 = vlaneseq
    %v1143 = vshrl.u32 %v1142, 7
    %v1144 = vsub.s32 0, %v1143
    %v1145 = vrot.slane %v1140, %v1144
    %v1148 = vsel %vm875, %v1128, 0
    %v1151 = vsel %vm875, %v1133, 0
    %1153 = vmatprep.subr.mxu0 0.0
    %1154 = vmatpush1.msra.mxu0 %v1136
    %1155 = vmatprep.subr.mxu0 0.0
    %1156 = vmatpush1.msra.mxu0 %v1137
    %1157 = vmatprep.subr.mxu0 0.0
    %1158 = vmatpush1.msra.mxu0 %v1138
    %1159 = vmatprep.subr.mxu0 0.0
    %1160 = vmatpush1.msra.mxu0 %v1139
    %1161 = vmatprep.subr.mxu0 0.0
    %1162 = vmatpush1.msra.mxu0 0.0
    %1163 = vmatprep.subr.mxu0 0.0
    %1164 = vmatpush1.msra.mxu0 0.0
    %1165 = vmatprep.subr.mxu0 0.0
    %1166 = vmatpush1.msra.mxu0 0.0
    %1167 = vmatprep.subr.mxu0 0.0
    %1168 = vmatpush1.msra.mxu0 0.0
    %1169 = vmatprep.subr.mxu0 0.0
    %1170 = vmatpush1.msra.mxu0 0.0
    %1171 = vmatprep.subr.mxu0 0.0
    %1172 = vmatpush1.msra.mxu0 0.0
    %1173 = vmatprep.subr.mxu0 0.0
    %1174 = vmatpush1.msra.mxu0 0.0
    %1175 = vmatprep.subr.mxu0 0.0
    %1176 = vmatpush1.msra.mxu0 0.0
    %1177 = vmatprep.subr.mxu0 0.0
    %1178 = vmatpush1.msra.mxu0 0.0
    %1179 = vmatprep.subr.mxu0 0.0
    %1180 = vmatpush1.msra.mxu0 0.0
    %1181 = vmatprep.subr.mxu0 0.0
    %1182 = vmatpush1.msra.mxu0 0.0
    %1183 = vmatprep.subr.mxu0 0.0
    %1184 = vmatpush1.msra.mxu0 0.0
    %1185 = vmatprep.subr.mxu0 0.0
    %1186 = vmatpush1.msra.mxu0 0.0
    %1187 = vmatprep.subr.mxu0 0.0
    %1188 = vmatpush1.msra.mxu0 0.0
    %1189 = vmatprep.subr.mxu0 0.0
    %1190 = vmatpush1.msra.mxu0 0.0
    %1191 = vmatprep.subr.mxu0 0.0
    %1192 = vmatpush1.msra.mxu0 0.0
    %1193 = vmatprep.subr.mxu0 0.0
    %1194 = vmatpush1.msra.mxu0 0.0
    %1195 = vmatprep.subr.mxu0 0.0
    %1196 = vmatpush1.msra.mxu0 0.0
    %1197 = vmatprep.subr.mxu0 0.0
    %1198 = vmatpush1.msra.mxu0 0.0
    %1199 = vmatprep.subr.mxu0 0.0
    %1200 = vmatpush1.msra.mxu0 0.0
    %1201 = vmatprep.subr.mxu0 0.0
    %1202 = vmatpush1.msra.mxu0 0.0
    %1203 = vmatprep.subr.mxu0 0.0
    %1204 = vmatpush1.msra.mxu0 0.0
    %1205 = vmatprep.subr.mxu0 0.0
    %1206 = vmatpush1.msra.mxu0 0.0
    %1207 = vmatprep.subr.mxu0 0.0
    %1208 = vmatpush1.msra.mxu0 0.0
    %1209 = vmatprep.subr.mxu0 0.0
    %1210 = vmatpush1.msra.mxu0 0.0
    %1211 = vmatprep.subr.mxu0 0.0
    %1212 = vmatpush1.msra.mxu0 0.0
    %1213 = vmatprep.subr.mxu0 0.0
    %1214 = vmatpush1.msra.mxu0 0.0
    %1215 = vmatprep.subr.mxu0 0.0
    %1216 = vmatpush1.msra.mxu0 0.0
    %1217 = vmatprep.mubr.f32.mxu0 0.0
    %1218 = vmatmul.mubr.f32.gmra.mrb[0].mxu0 %v1148
    %v1219 = vpop.f32.mrb[0].mxu0
    %v1220 = vadd.f32 %v1145, %v1219
    %v1221 = vpop.f32.mrb[0].mxu0
    %1222 = vmatprep.mubr.f32.mxu0 0.0
    %1223 = vmatmul.mubr.f32.gmra.mrb[0].mxu0 %v1151
    %v1224 = vpop.f32.mrb[0].mxu0
    %v1225 = vadd.f32 %v1145, %v1224
    %v1226 = vpop.f32.mrb[0].mxu0
    %1227 = vdwg.mxu0
    %1228 = vst.msk [vmem:[#allocation16] sm:$0xff] %vm875, %v1220
    %1229 = vst.msk [vmem:[#allocation16 + $0x8] sm:$0xff] %vm875, %v1225
    %v1230 = vld [vmem:[%s17] sm:$0xff]
    %v1231 = vld [vmem:[%s17 + $0x8] sm:$0xff]
    %v1232 = vld [vmem:[%s17 + $0x10] sm:$0xff]
    %v1233 = vld [vmem:[%s17 + $0x18] sm:$0xff]
    %v1234 = vld [vmem:[#allocation3] sm:$0x1]
    %v1236 = vlaneseq
    %v1237 = vshrl.u32 %v1236, 7
    %v1238 = vsub.s32 0, %v1237
    %v1239 = vrot.slane %v1234, %v1238
    %v1242 = vsel %vm875, %v1220, 0
    %v1245 = vsel %vm875, %v1225, 0
    %1247 = vmatprep.subr.mxu0 0.0
    %1248 = vmatpush1.msra.mxu0 %v1230
    %1249 = vmatprep.subr.mxu0 0.0
    %1250 = vmatpush1.msra.mxu0 %v1231
    %1251 = vmatprep.subr.mxu0 0.0
    %1252 = vmatpush1.msra.mxu0 %v1232
    %1253 = vmatprep.subr.mxu0 0.0
    %1254 = vmatpush1.msra.mxu0 %v1233
    %1255 = vmatprep.subr.mxu0 0.0
    %1256 = vmatpush1.msra.mxu0 0.0
    %1257 = vmatprep.subr.mxu0 0.0
    %1258 = vmatpush1.msra.mxu0 0.0
    %1259 = vmatprep.subr.mxu0 0.0
    %1260 = vmatpush1.msra.mxu0 0.0
    %1261 = vmatprep.subr.mxu0 0.0
    %1262 = vmatpush1.msra.mxu0 0.0
    %1263 = vmatprep.subr.mxu0 0.0
    %1264 = vmatpush1.msra.mxu0 0.0
    %1265 = vmatprep.subr.mxu0 0.0
    %1266 = vmatpush1.msra.mxu0 0.0
    %1267 = vmatprep.subr.mxu0 0.0
    %1268 = vmatpush1.msra.mxu0 0.0
    %1269 = vmatprep.subr.mxu0 0.0
    %1270 = vmatpush1.msra.mxu0 0.0
    %1271 = vmatprep.subr.mxu0 0.0
    %1272 = vmatpush1.msra.mxu0 0.0
    %1273 = vmatprep.subr.mxu0 0.0
    %1274 = vmatpush1.msra.mxu0 0.0
    %1275 = vmatprep.subr.mxu0 0.0
    %1276 = vmatpush1.msra.mxu0 0.0
    %1277 = vmatprep.subr.mxu0 0.0
    %1278 = vmatpush1.msra.mxu0 0.0
    %1279 = vmatprep.subr.mxu0 0.0
    %1280 = vmatpush1.msra.mxu0 0.0
    %1281 = vmatprep.subr.mxu0 0.0
    %1282 = vmatpush1.msra.mxu0 0.0
    %1283 = vmatprep.subr.mxu0 0.0
    %1284 = vmatpush1.msra.mxu0 0.0
    %1285 = vmatprep.subr.mxu0 0.0
    %1286 = vmatpush1.msra.mxu0 0.0
    %1287 = vmatprep.subr.mxu0 0.0
    %1288 = vmatpush1.msra.mxu0 0.0
    %1289 = vmatprep.subr.mxu0 0.0
    %1290 = vmatpush1.msra.mxu0 0.0
    %1291 = vmatprep.subr.mxu0 0.0
    %1292 = vmatpush1.msra.mxu0 0.0
    %1293 = vmatprep.subr.mxu0 0.0
    %1294 = vmatpush1.msra.mxu0 0.0
    %1295 = vmatprep.subr.mxu0 0.0
    %1296 = vmatpush1.msra.mxu0 0.0
    %1297 = vmatprep.subr.mxu0 0.0
    %1298 = vmatpush1.msra.mxu0 0.0
    %1299 = vmatprep.subr.mxu0 0.0
    %1300 = vmatpush1.msra.mxu0 0.0
    %1301 = vmatprep.subr.mxu0 0.0
    %1302 = vmatpush1.msra.mxu0 0.0
    %1303 = vmatprep.subr.mxu0 0.0
    %1304 = vmatpush1.msra.mxu0 0.0
    %1305 = vmatprep.subr.mxu0 0.0
    %1306 = vmatpush1.msra.mxu0 0.0
    %1307 = vmatprep.subr.mxu0 0.0
    %1308 = vmatpush1.msra.mxu0 0.0
    %1309 = vmatprep.subr.mxu0 0.0
    %1310 = vmatpush1.msra.mxu0 0.0
    %1311 = vmatprep.mubr.f32.mxu0 0.0
    %1312 = vmatmul.mubr.f32.gmra.mrb[0].mxu0 %v1242
    %v1313 = vpop.f32.mrb[0].mxu0
    %v1314 = vadd.f32 %v1239, %v1313
    %v1315 = vpop.f32.mrb[0].mxu0
    %1316 = vmatprep.mubr.f32.mxu0 0.0
    %1317 = vmatmul.mubr.f32.gmra.mrb[0].mxu0 %v1245
    %v1318 = vpop.f32.mrb[0].mxu0
    %v1319 = vadd.f32 %v1239, %v1318
    %v1320 = vpop.f32.mrb[0].mxu0
    %1321 = vdwg.mxu0
    %1322 = vst.msk [vmem:[%s19] sm:$0xff] %vm276, %v1314
    %1323 = vst.msk [vmem:[%s19 + $0x8] sm:$0xff] %vm276, %v1319
    // Predicated region
    $region106: #{tpu_custom_call.1} parent=1 // pred_check
      _
    $region107: #{tpu_custom_call.1} parent=1 // pred_check_branch
      %1325 = sbr.rel (0) target = $region109
    $region108: #{tpu_custom_call.1} parent=1 // pred_region
      _
    $region109: #{tpu_custom_call.1} parent=1 // pred_fallthru
      _
    // Predicated region
    $region110: #{tpu_custom_call.1} parent=1 // pred_check
      _
    $region111: #{tpu_custom_call.1} parent=1 // pred_check_branch
      %1327 = sbr.rel (0) target = $region113
    $region112: #{tpu_custom_call.1} parent=1 // pred_region
      %s1329 = ssub.s32 256, 256
      %1330 = vsyncadd [#allocation6], %s1329
      %s1331 = sshll.u32 [#allocation16], 4
      %s1332 = int_to_ptr.vmem [resolvable:$true] %s1331
      %1337 = dma.vmem_to_hbm [thread:$0]  %s1332, 256, %s20, [#allocation6], 128, 128, 8
    $region113: #{tpu_custom_call.1} parent=1 // pred_fallthru
      _
    // Predicated region
    $region114: #{tpu_custom_call.1} parent=1 // pred_check
      _
    $region115: #{tpu_custom_call.1} parent=1 // pred_check_branch
      %1339 = sbr.rel (0) target = $region117
    $region116: #{tpu_custom_call.1} parent=1 // pred_region
      _
    $region117: #{tpu_custom_call.1} parent=1 // pred_fallthru
      _
    // Predicated region
    $region118: #{tpu_custom_call.1} parent=1 // pred_check
      _
    $region119: #{tpu_custom_call.1} parent=1 // pred_check_branch
      %1341 = sbr.rel (0) target = $region121
    $region120: #{tpu_custom_call.1} parent=1 // pred_region
      %1342 = dma.done [#allocation6], 256
    $region121: #{tpu_custom_call.1} parent=1 // pred_fallthru
      _
    %1343 = vsyncpa [#allocation5], 1
    %1344 = vsyncpa [#allocation8], 1
    %1345 = vsyncpa [#allocation11], 1
    %1346 = vsyncpa [#allocation14], 1
    %1347 = vsyncpa [#allocation6], 1

</llo_original>
